<compile_context>
chip_gen: v7x
topology: tpu7x:2x2x1
jax: 0.10.0
libtpu: 0.0.40
codegen_flags: <defaults>
</compile_context>

<pallas_src>
from functools import partial

import numpy as np
import jax
import jax.numpy as jnp
from jax.experimental import pallas as pl
from jax.experimental.pallas import tpu as pltpu


def _cdiv(a, b):
    return -(-a // b)


def _round_up(v, m):
    return _cdiv(v, m) * m


def _tconv2x_phase_kernel(x_ref, w_ref, b_ref, o_ref, acc_ref, *, A, Wp, prefix, L):
    """One (batch, lane-tile) grid step of stride-2 ConvTranspose2d (phase form).

    x_ref:   (1, 1, C_in, prefix + L)  bf16 windowed input (zero prefix >= max shift)
    w_ref:   (A*A, 4*C_out, C_in)      bf16 per-shift weight blocks (phases folded in rows)
    b_ref:   (4*C_out, 1)              f32 bias per output row
    o_ref:   (1, 4*C_out, L)           lane tile of the 4 phase canvases (rows = p*C_out+co)
    acc_ref: (4*C_out, L)              f32 VMEM accumulator scratch
    """
    first = True
    for a in range(A):
        for d in range(A):
            s = a * Wp + d                      # flat canvas shift for this tap group
            p0 = prefix - s                     # static, >= 0 by construction
            xs = x_ref[0, 0, :, p0:p0 + L]      # (C_in, L) bf16, static unaligned slice
            z = jnp.dot(w_ref[a * A + d], xs,
                        preferred_element_type=jnp.float32)   # (4*C_out, L) f32 on MXU
            if first:
                acc_ref[...] = z
                first = False
            else:
                acc_ref[...] += z
    o_ref[0] = (acc_ref[...] + b_ref[...]).astype(o_ref.dtype)


def transposed_upsample_forward(x, weight, bias, *, lane_tile=1024):
    """ConvTranspose2d(C_in, C_out, kernel_size=K, stride=2, padding=0).

    x:      [B, C_in, H, W]
    weight: [C_in, C_out, K, K]   (PyTorch ConvTranspose2d weight layout)
    bias:   [C_out]
    returns [B, C_out, 2H + K - 2, 2W + K - 2]  in x.dtype

    lane_tile: target lane-tile size (multiple of 128). ~1024 is a good default for
    v5e/v6e; use ~512 on v7x (64 MiB VMEM per TensorCore).
    """
    stride = 2
    B, C_in, H, W = x.shape
    wc_in, C_out, K, K2 = weight.shape
    assert wc_in == C_in and K == K2
    # The flat-shift phase decomposition below assumes stride==2 and odd K
    # (canvas right/bottom pad == (K-1)//2 covers every tap shift).
    assert K % 2 == 1, "kernel_size must be odd for this kernel (stride-2 phase decomposition)"

    pad = (K - 1) // 2
    A = pad + 1                          # number of distinct per-axis shifts
    Hp, Wp = H + pad, W + pad            # per-phase output canvas
    Tp = Hp * Wp
    smax = pad * Wp + pad                # largest flat canvas shift
    H_out = (H - 1) * stride + K
    W_out = (W - 1) * stride + K
    C4 = 4 * C_out
    out_dtype = x.dtype

    # ---- lane tiling (second, parallel grid axis) ----
    L = _round_up(min(max(lane_tile, 128), _round_up(Tp, 128)), 128)
    n_tiles = _cdiv(Tp, L)
    Tp_pad = n_tiles * L

    # ---- single-pass input pad (cast to bf16 first: halves pad/DMA bytes) ----
    t_r = pad + 1                                   # top rows -> zero prefix >= smax lanes
    b_r = pad + _cdiv(Tp_pad - Tp, Wp)              # canvas bottom pad + lane-tile tail
    prefix = t_r * Wp
    xq = jnp.pad(x.astype(jnp.bfloat16), ((0, 0), (0, 0), (t_r, b_r), (0, pad)))
    xq = xq.reshape(B, C_in, (t_r + H + b_r) * Wp)
    WIN = prefix + L
    # Overlapping per-tile windows so every in-kernel shift slice is static and the
    # per-step x block is bounded (x is the small tensor; duplication is ~prefix/L).
    xo = jnp.stack([xq[:, :, jt * L: jt * L + WIN] for jt in range(n_tiles)], axis=1)
    # xo: (B, n_tiles, C_in, WIN)

    # ---- per-shift weight blocks: (A*A, 4*C_out, C_in), bf16 ----
    wq = jnp.pad(weight.astype(jnp.float32),
                 ((0, 0), (0, 0), (0, 2 * A - K), (0, 2 * A - K)))
    wq = wq.reshape(C_in, C_out, A, 2, A, 2)          # (ci, co, a, r, d, c)
    wq = jnp.transpose(wq, (2, 4, 3, 5, 1, 0))        # (a, d, r, c, co, ci)
    w_all = wq.reshape(A * A, C4, C_in).astype(jnp.bfloat16)

    b_all = jnp.tile(bias.astype(jnp.float32), 4).reshape(C4, 1)

    kernel = partial(_tconv2x_phase_kernel, A=A, Wp=Wp, prefix=prefix, L=L)

    # ---- VMEM budget (double-buffered x/out blocks + weights + f32 scratch) ----
    itemsize = np.dtype(out_dtype).itemsize
    est = (2 * C_in * WIN * 2              # x window, bf16, 2 buffers
           + 2 * A * A * C4 * C_in * 2     # weights, bf16
           + 2 * C4 * L * itemsize         # out block, 2 buffers
           + C4 * L * 4                    # f32 accumulator scratch
           + C4 * 4)
    vmem_limit = int(min(max(2 * est, 32 * 2**20), 64 * 2**20))

    # NOTE: with tiny channel counts (e.g. C_in=4) the MXU contraction dim is mostly
    # idle and the kernel is store/layout bound; the stacked-shift matmul pays off at
    # production channel counts (>=128).
    phases = pl.pallas_call(
        kernel,
        out_shape=jax.ShapeDtypeStruct((B, C4, Tp_pad), out_dtype),
        grid_spec=pltpu.PrefetchScalarGridSpec(
            num_scalar_prefetch=0,
            grid=(B, n_tiles),
            in_specs=[
                pl.BlockSpec((1, 1, C_in, WIN), lambda b, j: (b, j, 0, 0)),   # x window
                pl.BlockSpec((A * A, C4, C_in), lambda b, j: (0, 0, 0)),      # shift weights
                pl.BlockSpec((C4, 1), lambda b, j: (0, 0)),                   # bias
            ],
            out_specs=pl.BlockSpec((1, C4, L), lambda b, j: (b, 0, j)),
            scratch_shapes=[pltpu.VMEM((C4, L), jnp.float32)],
        ),
        compiler_params=pltpu.CompilerParams(
            dimension_semantics=("parallel", "parallel"),
            vmem_limit_bytes=vmem_limit,
        ),
    )(xo, w_all, b_all)

    # TODO(synk): the stride-2 phase interleave + crop below is one extra XLA copy of the
    # upsampled tensor; fusing it into the kernel needs parity-strided lane stores, which
    # are kept out of the kernel for lowering robustness.
    ph = phases[:, :, :Tp].reshape(B, 2, 2, C_out, Hp, Wp)
    y = jnp.transpose(ph, (0, 3, 4, 1, 5, 2)).reshape(B, C_out, 2 * Hp, 2 * Wp)
    return y[:, :, :H_out, :W_out]


def _reference_forward(x, weight, bias, *, stride=2):
    """Host-side numpy scatter-add reference mirroring PyTorch ConvTranspose2d."""
    xn = np.asarray(x, np.float32)
    wn = np.asarray(weight, np.float32)
    bn = np.asarray(bias, np.float32)
    B, C_in, H, W = xn.shape
    _, C_out, K, _ = wn.shape
    H_out = (H - 1) * stride + K
    W_out = (W - 1) * stride + K
    y = np.zeros((B, C_out, H_out, W_out), np.float32)
    for kh in range(K):
        for kw in range(K):
            z = np.einsum('bchw,co->bohw', xn, wn[:, :, kh, kw])
            y[:, :, kh:kh + stride * H:stride, kw:kw + stride * W:stride] += z
    return y + bn.reshape(1, C_out, 1, 1)


if __name__ == "__main__":
    # Small shapes consistent with TransposedUpsample(channels=4, ks=5).
    B, C, H, W = 2, 4, 16, 16
    ks = 5
    out_channels = C                     # module default: out_channels = channels

    key = jax.random.PRNGKey(0)
    k_x, k_w, k_b = jax.random.split(key, 3)
    x = jax.random.normal(k_x, (B, C, H, W), dtype=jnp.float32)
    weight = (0.1 * jax.random.normal(k_w, (C, out_channels, ks, ks))).astype(jnp.float32)
    bias = (0.1 * jax.random.normal(k_b, (out_channels,))).astype(jnp.float32)

    out = transposed_upsample_forward(x, weight, bias)
    out = jax.block_until_ready(out)

    # Reference uses the same bf16 rounding of x / weights that the kernel feeds the MXU.
    x_r = np.asarray(x.astype(jnp.bfloat16).astype(jnp.float32))
    w_r = np.asarray(weight.astype(jnp.bfloat16).astype(jnp.float32))
    ref = _reference_forward(x_r, w_r, np.asarray(bias))

    assert out.shape == (B, out_channels, 2 * H + ks - 2, 2 * W + ks - 2), out.shape
    out_np = np.asarray(out, np.float32)
    max_err = float(np.max(np.abs(out_np - ref)))
    assert np.allclose(out_np, ref, atol=2e-3, rtol=2e-3), f"max abs err {max_err}"
    print("KERNEL_OK")
</pallas_src>

<mosaic_0001>
module attributes {stable_mosaic.version = 11 : i64} {
  func.func @_tconv2x_phase_kernel(%arg0: i32, %arg1: i32, %arg2: memref<1x1x4x438xbf16, #tpu.memory_space<vmem>>, %arg3: memref<9x16x4xbf16, #tpu.memory_space<vmem>>, %arg4: memref<16x1xf32, #tpu.memory_space<vmem>>, %arg5: memref<1x16x384xf32, #tpu.memory_space<vmem>>, %arg6: memref<16x384xf32, #tpu.memory_space<vmem>>) attributes {dimension_semantics = [#tpu.dimension_semantics<parallel>, #tpu.dimension_semantics<parallel>], iteration_bounds = array<i64: 2, 1>, scalar_prefetch = 0 : i64, scratch_operands = 1 : i64, tpu.core_type = #tpu.core_type<tc>, window_params = [{transform_indices = @transform_0, window_bounds = array<i64: 1, 1, 4, 438>}, {pipeline_mode = #tpu.pipeline_mode<synchronous>, transform_indices = @transform_1, window_bounds = array<i64: 9, 16, 4>}, {pipeline_mode = #tpu.pipeline_mode<synchronous>, transform_indices = @transform_2, window_bounds = array<i64: 16, 1>}, {transform_indices = @transform_3, window_bounds = array<i64: 1, 16, 384>}]} {
    %c0 = arith.constant 0 : index
    %c0_0 = arith.constant 0 : index
    %c0_1 = arith.constant 0 : index
    %c54 = arith.constant 54 : index
    %0 = vector.load %arg2[%c0, %c0_0, %c0_1, %c54] : memref<1x1x4x438xbf16, #tpu.memory_space<vmem>>, vector<1x1x4x384xbf16>
    %1 = vector.shape_cast %0 : vector<1x1x4x384xbf16> to vector<4x384xbf16>
    %c0_2 = arith.constant 0 : index
    %c0_3 = arith.constant 0 : index
    %c0_4 = arith.constant 0 : index
    %2 = vector.load %arg3[%c0_2, %c0_3, %c0_4] : memref<9x16x4xbf16, #tpu.memory_space<vmem>>, vector<1x16x4xbf16>
    %3 = vector.shape_cast %2 : vector<1x16x4xbf16> to vector<16x4xbf16>
    %cst = arith.constant dense<0.000000e+00> : vector<16x384xf32>
    %4 = tpu.matmul %3, %1, %cst {dimension_numbers = #tpu.dot_dimension_numbers<[1], [0], [0], [1], [0, 0, 1, 1], [], []>} : vector<16x4xbf16>, vector<4x384xbf16>, vector<16x384xf32> -> vector<16x384xf32>
    %c0_5 = arith.constant 0 : index
    %c0_6 = arith.constant 0 : index
    %5 = vector.load %arg6[%c0_5, %c0_6] : memref<16x384xf32, #tpu.memory_space<vmem>>, vector<16x384xf32>
    tpu.vector_store %arg6[%c0_5, %c0_6], %4 {strides = array<i32>} : memref<16x384xf32, #tpu.memory_space<vmem>>, vector<16x384xf32>,
    %c0_7 = arith.constant 0 : index
    %c0_8 = arith.constant 0 : index
    %c0_9 = arith.constant 0 : index
    %c53 = arith.constant 53 : index
    %6 = vector.load %arg2[%c0_7, %c0_8, %c0_9, %c53] : memref<1x1x4x438xbf16, #tpu.memory_space<vmem>>, vector<1x1x4x384xbf16>
    %7 = vector.shape_cast %6 : vector<1x1x4x384xbf16> to vector<4x384xbf16>
    %c1 = arith.constant 1 : index
    %c0_10 = arith.constant 0 : index
    %c0_11 = arith.constant 0 : index
    %8 = vector.load %arg3[%c1, %c0_10, %c0_11] : memref<9x16x4xbf16, #tpu.memory_space<vmem>>, vector<1x16x4xbf16>
    %9 = vector.shape_cast %8 : vector<1x16x4xbf16> to vector<16x4xbf16>
    %cst_12 = arith.constant dense<0.000000e+00> : vector<16x384xf32>
    %10 = tpu.matmul %9, %7, %cst_12 {dimension_numbers = #tpu.dot_dimension_numbers<[1], [0], [0], [1], [0, 0, 1, 1], [], []>} : vector<16x4xbf16>, vector<4x384xbf16>, vector<16x384xf32> -> vector<16x384xf32>
    %c0_13 = arith.constant 0 : index
    %c0_14 = arith.constant 0 : index
    %11 = vector.load %arg6[%c0_13, %c0_14] : memref<16x384xf32, #tpu.memory_space<vmem>>, vector<16x384xf32>
    %12 = arith.addf %11, %10 : vector<16x384xf32>
    %c0_15 = arith.constant 0 : index
    %c0_16 = arith.constant 0 : index
    %13 = vector.load %arg6[%c0_15, %c0_16] : memref<16x384xf32, #tpu.memory_space<vmem>>, vector<16x384xf32>
    tpu.vector_store %arg6[%c0_15, %c0_16], %12 {strides = array<i32>} : memref<16x384xf32, #tpu.memory_space<vmem>>, vector<16x384xf32>,
    %c0_17 = arith.constant 0 : index
    %c0_18 = arith.constant 0 : index
    %c0_19 = arith.constant 0 : index
    %c52 = arith.constant 52 : index
    %14 = vector.load %arg2[%c0_17, %c0_18, %c0_19, %c52] : memref<1x1x4x438xbf16, #tpu.memory_space<vmem>>, vector<1x1x4x384xbf16>
    %15 = vector.shape_cast %14 : vector<1x1x4x384xbf16> to vector<4x384xbf16>
    %c2 = arith.constant 2 : index
    %c0_20 = arith.constant 0 : index
    %c0_21 = arith.constant 0 : index
    %16 = vector.load %arg3[%c2, %c0_20, %c0_21] : memref<9x16x4xbf16, #tpu.memory_space<vmem>>, vector<1x16x4xbf16>
    %17 = vector.shape_cast %16 : vector<1x16x4xbf16> to vector<16x4xbf16>
    %cst_22 = arith.constant dense<0.000000e+00> : vector<16x384xf32>
    %18 = tpu.matmul %17, %15, %cst_22 {dimension_numbers = #tpu.dot_dimension_numbers<[1], [0], [0], [1], [0, 0, 1, 1], [], []>} : vector<16x4xbf16>, vector<4x384xbf16>, vector<16x384xf32> -> vector<16x384xf32>
    %c0_23 = arith.constant 0 : index
    %c0_24 = arith.constant 0 : index
    %19 = vector.load %arg6[%c0_23, %c0_24] : memref<16x384xf32, #tpu.memory_space<vmem>>, vector<16x384xf32>
    %20 = arith.addf %19, %18 : vector<16x384xf32>
    %c0_25 = arith.constant 0 : index
    %c0_26 = arith.constant 0 : index
    %21 = vector.load %arg6[%c0_25, %c0_26] : memref<16x384xf32, #tpu.memory_space<vmem>>, vector<16x384xf32>
    tpu.vector_store %arg6[%c0_25, %c0_26], %20 {strides = array<i32>} : memref<16x384xf32, #tpu.memory_space<vmem>>, vector<16x384xf32>,
    %c0_27 = arith.constant 0 : index
    %c0_28 = arith.constant 0 : index
    %c0_29 = arith.constant 0 : index
    %c36 = arith.constant 36 : index
    %22 = vector.load %arg2[%c0_27, %c0_28, %c0_29, %c36] : memref<1x1x4x438xbf16, #tpu.memory_space<vmem>>, vector<1x1x4x384xbf16>
    %23 = vector.shape_cast %22 : vector<1x1x4x384xbf16> to vector<4x384xbf16>
    %c3 = arith.constant 3 : index
    %c0_30 = arith.constant 0 : index
    %c0_31 = arith.constant 0 : index
    %24 = vector.load %arg3[%c3, %c0_30, %c0_31] : memref<9x16x4xbf16, #tpu.memory_space<vmem>>, vector<1x16x4xbf16>
    %25 = vector.shape_cast %24 : vector<1x16x4xbf16> to vector<16x4xbf16>
    %cst_32 = arith.constant dense<0.000000e+00> : vector<16x384xf32>
    %26 = tpu.matmul %25, %23, %cst_32 {dimension_numbers = #tpu.dot_dimension_numbers<[1], [0], [0], [1], [0, 0, 1, 1], [], []>} : vector<16x4xbf16>, vector<4x384xbf16>, vector<16x384xf32> -> vector<16x384xf32>
    %c0_33 = arith.constant 0 : index
    %c0_34 = arith.constant 0 : index
    %27 = vector.load %arg6[%c0_33, %c0_34] : memref<16x384xf32, #tpu.memory_space<vmem>>, vector<16x384xf32>
    %28 = arith.addf %27, %26 : vector<16x384xf32>
    %c0_35 = arith.constant 0 : index
    %c0_36 = arith.constant 0 : index
    %29 = vector.load %arg6[%c0_35, %c0_36] : memref<16x384xf32, #tpu.memory_space<vmem>>, vector<16x384xf32>
    tpu.vector_store %arg6[%c0_35, %c0_36], %28 {strides = array<i32>} : memref<16x384xf32, #tpu.memory_space<vmem>>, vector<16x384xf32>,
    %c0_37 = arith.constant 0 : index
    %c0_38 = arith.constant 0 : index
    %c0_39 = arith.constant 0 : index
    %c35 = arith.constant 35 : index
    %30 = vector.load %arg2[%c0_37, %c0_38, %c0_39, %c35] : memref<1x1x4x438xbf16, #tpu.memory_space<vmem>>, vector<1x1x4x384xbf16>
    %31 = vector.shape_cast %30 : vector<1x1x4x384xbf16> to vector<4x384xbf16>
    %c4 = arith.constant 4 : index
    %c0_40 = arith.constant 0 : index
    %c0_41 = arith.constant 0 : index
    %32 = vector.load %arg3[%c4, %c0_40, %c0_41] : memref<9x16x4xbf16, #tpu.memory_space<vmem>>, vector<1x16x4xbf16>
    %33 = vector.shape_cast %32 : vector<1x16x4xbf16> to vector<16x4xbf16>
    %cst_42 = arith.constant dense<0.000000e+00> : vector<16x384xf32>
    %34 = tpu.matmul %33, %31, %cst_42 {dimension_numbers = #tpu.dot_dimension_numbers<[1], [0], [0], [1], [0, 0, 1, 1], [], []>} : vector<16x4xbf16>, vector<4x384xbf16>, vector<16x384xf32> -> vector<16x384xf32>
    %c0_43 = arith.constant 0 : index
    %c0_44 = arith.constant 0 : index
    %35 = vector.load %arg6[%c0_43, %c0_44] : memref<16x384xf32, #tpu.memory_space<vmem>>, vector<16x384xf32>
    %36 = arith.addf %35, %34 : vector<16x384xf32>
    %c0_45 = arith.constant 0 : index
    %c0_46 = arith.constant 0 : index
    %37 = vector.load %arg6[%c0_45, %c0_46] : memref<16x384xf32, #tpu.memory_space<vmem>>, vector<16x384xf32>
    tpu.vector_store %arg6[%c0_45, %c0_46], %36 {strides = array<i32>} : memref<16x384xf32, #tpu.memory_space<vmem>>, vector<16x384xf32>,
    %c0_47 = arith.constant 0 : index
    %c0_48 = arith.constant 0 : index
    %c0_49 = arith.constant 0 : index
    %c34 = arith.constant 34 : index
    %38 = vector.load %arg2[%c0_47, %c0_48, %c0_49, %c34] : memref<1x1x4x438xbf16, #tpu.memory_space<vmem>>, vector<1x1x4x384xbf16>
    %39 = vector.shape_cast %38 : vector<1x1x4x384xbf16> to vector<4x384xbf16>
    %c5 = arith.constant 5 : index
    %c0_50 = arith.constant 0 : index
    %c0_51 = arith.constant 0 : index
    %40 = vector.load %arg3[%c5, %c0_50, %c0_51] : memref<9x16x4xbf16, #tpu.memory_space<vmem>>, vector<1x16x4xbf16>
    %41 = vector.shape_cast %40 : vector<1x16x4xbf16> to vector<16x4xbf16>
    %cst_52 = arith.constant dense<0.000000e+00> : vector<16x384xf32>
    %42 = tpu.matmul %41, %39, %cst_52 {dimension_numbers = #tpu.dot_dimension_numbers<[1], [0], [0], [1], [0, 0, 1, 1], [], []>} : vector<16x4xbf16>, vector<4x384xbf16>, vector<16x384xf32> -> vector<16x384xf32>
    %c0_53 = arith.constant 0 : index
    %c0_54 = arith.constant 0 : index
    %43 = vector.load %arg6[%c0_53, %c0_54] : memref<16x384xf32, #tpu.memory_space<vmem>>, vector<16x384xf32>
    %44 = arith.addf %43, %42 : vector<16x384xf32>
    %c0_55 = arith.constant 0 : index
    %c0_56 = arith.constant 0 : index
    %45 = vector.load %arg6[%c0_55, %c0_56] : memref<16x384xf32, #tpu.memory_space<vmem>>, vector<16x384xf32>
    tpu.vector_store %arg6[%c0_55, %c0_56], %44 {strides = array<i32>} : memref<16x384xf32, #tpu.memory_space<vmem>>, vector<16x384xf32>,
    %c0_57 = arith.constant 0 : index
    %c0_58 = arith.constant 0 : index
    %c0_59 = arith.constant 0 : index
    %c18 = arith.constant 18 : index
    %46 = vector.load %arg2[%c0_57, %c0_58, %c0_59, %c18] : memref<1x1x4x438xbf16, #tpu.memory_space<vmem>>, vector<1x1x4x384xbf16>
    %47 = vector.shape_cast %46 : vector<1x1x4x384xbf16> to vector<4x384xbf16>
    %c6 = arith.constant 6 : index
    %c0_60 = arith.constant 0 : index
    %c0_61 = arith.constant 0 : index
    %48 = vector.load %arg3[%c6, %c0_60, %c0_61] : memref<9x16x4xbf16, #tpu.memory_space<vmem>>, vector<1x16x4xbf16>
    %49 = vector.shape_cast %48 : vector<1x16x4xbf16> to vector<16x4xbf16>
    %cst_62 = arith.constant dense<0.000000e+00> : vector<16x384xf32>
    %50 = tpu.matmul %49, %47, %cst_62 {dimension_numbers = #tpu.dot_dimension_numbers<[1], [0], [0], [1], [0, 0, 1, 1], [], []>} : vector<16x4xbf16>, vector<4x384xbf16>, vector<16x384xf32> -> vector<16x384xf32>
    %c0_63 = arith.constant 0 : index
    %c0_64 = arith.constant 0 : index
    %51 = vector.load %arg6[%c0_63, %c0_64] : memref<16x384xf32, #tpu.memory_space<vmem>>, vector<16x384xf32>
    %52 = arith.addf %51, %50 : vector<16x384xf32>
    %c0_65 = arith.constant 0 : index
    %c0_66 = arith.constant 0 : index
    %53 = vector.load %arg6[%c0_65, %c0_66] : memref<16x384xf32, #tpu.memory_space<vmem>>, vector<16x384xf32>
    tpu.vector_store %arg6[%c0_65, %c0_66], %52 {strides = array<i32>} : memref<16x384xf32, #tpu.memory_space<vmem>>, vector<16x384xf32>,
    %c0_67 = arith.constant 0 : index
    %c0_68 = arith.constant 0 : index
    %c0_69 = arith.constant 0 : index
    %c17 = arith.constant 17 : index
    %54 = vector.load %arg2[%c0_67, %c0_68, %c0_69, %c17] : memref<1x1x4x438xbf16, #tpu.memory_space<vmem>>, vector<1x1x4x384xbf16>
    %55 = vector.shape_cast %54 : vector<1x1x4x384xbf16> to vector<4x384xbf16>
    %c7 = arith.constant 7 : index
    %c0_70 = arith.constant 0 : index
    %c0_71 = arith.constant 0 : index
    %56 = vector.load %arg3[%c7, %c0_70, %c0_71] : memref<9x16x4xbf16, #tpu.memory_space<vmem>>, vector<1x16x4xbf16>
    %57 = vector.shape_cast %56 : vector<1x16x4xbf16> to vector<16x4xbf16>
    %cst_72 = arith.constant dense<0.000000e+00> : vector<16x384xf32>
    %58 = tpu.matmul %57, %55, %cst_72 {dimension_numbers = #tpu.dot_dimension_numbers<[1], [0], [0], [1], [0, 0, 1, 1], [], []>} : vector<16x4xbf16>, vector<4x384xbf16>, vector<16x384xf32> -> vector<16x384xf32>
    %c0_73 = arith.constant 0 : index
    %c0_74 = arith.constant 0 : index
    %59 = vector.load %arg6[%c0_73, %c0_74] : memref<16x384xf32, #tpu.memory_space<vmem>>, vector<16x384xf32>
    %60 = arith.addf %59, %58 : vector<16x384xf32>
    %c0_75 = arith.constant 0 : index
    %c0_76 = arith.constant 0 : index
    %61 = vector.load %arg6[%c0_75, %c0_76] : memref<16x384xf32, #tpu.memory_space<vmem>>, vector<16x384xf32>
    tpu.vector_store %arg6[%c0_75, %c0_76], %60 {strides = array<i32>} : memref<16x384xf32, #tpu.memory_space<vmem>>, vector<16x384xf32>,
    %c0_77 = arith.constant 0 : index
    %c0_78 = arith.constant 0 : index
    %c0_79 = arith.constant 0 : index
    %c16 = arith.constant 16 : index
    %62 = vector.load %arg2[%c0_77, %c0_78, %c0_79, %c16] : memref<1x1x4x438xbf16, #tpu.memory_space<vmem>>, vector<1x1x4x384xbf16>
    %63 = vector.shape_cast %62 : vector<1x1x4x384xbf16> to vector<4x384xbf16>
    %c8 = arith.constant 8 : index
    %c0_80 = arith.constant 0 : index
    %c0_81 = arith.constant 0 : index
    %64 = vector.load %arg3[%c8, %c0_80, %c0_81] : memref<9x16x4xbf16, #tpu.memory_space<vmem>>, vector<1x16x4xbf16>
    %65 = vector.shape_cast %64 : vector<1x16x4xbf16> to vector<16x4xbf16>
    %cst_82 = arith.constant dense<0.000000e+00> : vector<16x384xf32>
    %66 = tpu.matmul %65, %63, %cst_82 {dimension_numbers = #tpu.dot_dimension_numbers<[1], [0], [0], [1], [0, 0, 1, 1], [], []>} : vector<16x4xbf16>, vector<4x384xbf16>, vector<16x384xf32> -> vector<16x384xf32>
    %c0_83 = arith.constant 0 : index
    %c0_84 = arith.constant 0 : index
    %67 = vector.load %arg6[%c0_83, %c0_84] : memref<16x384xf32, #tpu.memory_space<vmem>>, vector<16x384xf32>
    %68 = arith.addf %67, %66 : vector<16x384xf32>
    %c0_85 = arith.constant 0 : index
    %c0_86 = arith.constant 0 : index
    %69 = vector.load %arg6[%c0_85, %c0_86] : memref<16x384xf32, #tpu.memory_space<vmem>>, vector<16x384xf32>
    tpu.vector_store %arg6[%c0_85, %c0_86], %68 {strides = array<i32>} : memref<16x384xf32, #tpu.memory_space<vmem>>, vector<16x384xf32>,
    %c0_87 = arith.constant 0 : index
    %c0_88 = arith.constant 0 : index
    %70 = vector.load %arg6[%c0_87, %c0_88] : memref<16x384xf32, #tpu.memory_space<vmem>>, vector<16x384xf32>
    %c0_89 = arith.constant 0 : index
    %c0_90 = arith.constant 0 : index
    %71 = vector.load %arg4[%c0_89, %c0_90] : memref<16x1xf32, #tpu.memory_space<vmem>>, vector<16x1xf32>
    %72 = vector.broadcast %71 : vector<16x1xf32> to vector<16x384xf32>
    %73 = arith.addf %70, %72 : vector<16x384xf32>
    %c0_91 = arith.constant 0 : index
    %c0_92 = arith.constant 0 : index
    %c0_93 = arith.constant 0 : index
    %74 = vector.load %arg5[%c0_91, %c0_92, %c0_93] : memref<1x16x384xf32, #tpu.memory_space<vmem>>, vector<1x16x384xf32>
    %75 = vector.shape_cast %74 : vector<1x16x384xf32> to vector<16x384xf32>
    %76 = vector.shape_cast %73 : vector<16x384xf32> to vector<1x16x384xf32>
    tpu.vector_store %arg5[%c0_91, %c0_92, %c0_93], %76 {strides = array<i32>} : memref<1x16x384xf32, #tpu.memory_space<vmem>>, vector<1x16x384xf32>,
    return
  }
  func.func @transform_0(%arg0: i32, %arg1: i32) -> (i32, i32, i32, i32) {
    %c0_i32 = arith.constant 0 : i32
    %c0_i32_0 = arith.constant 0 : i32
    %c0_i32_1 = arith.constant 0 : i32
    return %arg0, %arg1, %c0_i32, %c0_i32_0 : i32, i32, i32, i32
  }
  func.func @transform_1(%arg0: i32, %arg1: i32) -> (i32, i32, i32) {
    %c0_i32 = arith.constant 0 : i32
    %c0_i32_0 = arith.constant 0 : i32
    %c0_i32_1 = arith.constant 0 : i32
    %c0_i32_2 = arith.constant 0 : i32
    return %c0_i32, %c0_i32_0, %c0_i32_1 : i32, i32, i32
  }
  func.func @transform_2(%arg0: i32, %arg1: i32) -> (i32, i32) {
    %c0_i32 = arith.constant 0 : i32
    %c0_i32_0 = arith.constant 0 : i32
    %c0_i32_1 = arith.constant 0 : i32
    return %c0_i32, %c0_i32_0 : i32, i32
  }
  func.func @transform_3(%arg0: i32, %arg1: i32) -> (i32, i32, i32) {
    %c0_i32 = arith.constant 0 : i32
    %c0_i32_0 = arith.constant 0 : i32
    return %arg0, %c0_i32, %arg1 : i32, i32, i32
  }
}

</mosaic_0001>

<llo_original>
// kernel: tpu_custom_call.1
$region0: #{tpu_custom_call.1}
  #allocation0 [shape = 'u32[]', space=smem, size = 0x4, offset = 0x4, fixed_abs, tag = 'smem constant byte address 0x4 - core index']
  #allocation1 [shape = 'u32[144,128]{1,0:T(1,128)}', space=vmem, size = 0x12000, scoped, tag = 'internal scratch']
  #allocation2 [shape = 'f32[16,384]{1,0:T(8,128)}', space=vmem, size = 0x6000, scoped, tag = 'scratch operand']
  %s0 = inlined_call_operand.vmem [shape: bf16[2,1,4,438], index: 0, kind: input, shape index: {}]
  %s1 = inlined_call_operand.vmem [shape: bf16[9,16,4], index: 1, kind: input, shape index: {}]
  %s2 = inlined_call_operand.vmem [shape: f32[16,1], index: 2, kind: input, shape index: {}]
  %s3 = inlined_call_operand.hbm [shape: f32[2,16,384], index: 3, kind: output, shape index: {}]
  %s4 = sld [smem:[#allocation0]]
  $region45: #{tpu_custom_call.1} parent=0
    _
  %s6 = ssub.s32 1, %s4
  %s7 = scalar_select 0, %s6, %s4
  $region1: #{tpu_custom_call.1} parent=0
    #allocation3 [shape = 'u8[49152]{0}', space=vmem, size = 0xc000, scoped, tag = 'output window, operand 0']
    #allocation4 [shape = 's32[2]{0}', space=sflag, size = 0x8, scoped, tag = 'scoped memory for tpu_custom_call.1']
    %8 = vsyncpa [#allocation4], 0
    %s9 = scalar_lea.sflag [#allocation4], 1
    %10 = vsyncpa %s9, 0
    loop: start=0, step=1, limit=4
    $region2: #{tpu_custom_call.1} parent=1 // loop_pre_header
      _
    $region3: #{tpu_custom_call.1} parent=1 // loop_header
      %s12 = sphi 0, %s16
      %p13 = scmp.ge.s32.totalorder %s12, 4
      %s19 = sphi 0, %s31
      %s20 = sphi 0, %s27
      %s21 = sphi 0, %s19
      %s22 = sphi 0, %s20
      %s23 = sphi 0, %s21
      %s24 = sphi 0, %s22
      %s36 = sphi 0, %s38
      %s39 = sphi 0, %s36
      %s40 = sphi 0, %s39
      %s56 = sphi 0, %s40
      %s60 = sphi 0, %s60
      %s62 = sphi 0, %s60
      %s63 = sphi 0, %s62
      %s77 = sphi 0, %s63
      %s81 = sphi 0, %s81
      %s83 = sphi 0, %s81
      %s84 = sphi 0, %s83
      %s98 = sphi 0, %s84
      %s106 = sphi 0, %s108
      %s109 = sphi 0, %s106
      %s110 = sphi 0, %s109
      %s126 = sphi 0, %s110
    $region4: #{tpu_custom_call.1} parent=1 // loop_header_branch
      %15 = sbr.rel (%p13) target = $region8
    $region5: #{tpu_custom_call.1} parent=1 // loop_body
      %s17 = ssub.s32 %s12, 1
      %s18 = ssub.s32 %s12, 2
      %s25 = sadd.s32 1, %s20
      %p26 = scmp.ge.s32.totalorder %s25, 1
      %s27 = scalar_select %p26, 0, %s25
      %s28 = sadd.s32 1, %s19
      %s29 = scalar_select %p26, %s28, %s19
      %p30 = scmp.ge.s32.totalorder %s29, 2
      %s31 = scalar_select %p30, 0, %s29
      %s32 = ssub.s32 %s19, %s31
      %s33 = ssub.s32 %s20, %s27
      %s34 = sor.u32 %s32, %s33
      %p35 = scmp.eq.s32.totalorder %s34, 0
      %s37 = sadd.s32 %s36, 1
      %s38 = scalar_select %p35, %s36, %s37
      %p41 = pneg %p35
      %p42 = scmp.eq.s32.totalorder %s12, 1
      %p43 = por %p41, %p42
      %p44 = scmp.ne.s32.totalorder %s36, %s39
      %p45 = scmp.eq.s32.totalorder %s12, 0
      %p46 = por %p44, %p45
      %p47 = scmp.ne.s32.totalorder %s36, %s39
      %p48 = scmp.eq.s32.totalorder %s17, 1
      %p49 = por %p47, %p48
      %p50 = scmp.ne.s32.totalorder %s39, %s40
      %p51 = scmp.eq.s32.totalorder %s17, 0
      %p52 = por %p50, %p51
      %p53 = scmp.ne.s32.totalorder %s39, %s40
      %p54 = scmp.eq.s32.totalorder %s18, 1
      %p55 = por %p53, %p54
      %p57 = scmp.ne.s32.totalorder %s40, %s56
      %p58 = scmp.eq.s32.totalorder %s18, 0
      %p59 = por %p57, %p58
      %s61 = sadd.s32 %s60, 1
      %p64 = scmp.eq.s32.totalorder %s12, 1
      %p65 = scmp.ne.s32.totalorder %s60, %s62
      %p66 = scmp.eq.s32.totalorder %s12, 0
      %p67 = por %p65, %p66
      %p68 = scmp.ne.s32.totalorder %s60, %s62
      %p69 = scmp.eq.s32.totalorder %s17, 1
      %p70 = por %p68, %p69
      %p71 = scmp.ne.s32.totalorder %s62, %s63
      %p72 = scmp.eq.s32.totalorder %s17, 0
      %p73 = por %p71, %p72
      %p74 = scmp.ne.s32.totalorder %s62, %s63
      %p75 = scmp.eq.s32.totalorder %s18, 1
      %p76 = por %p74, %p75
      %p78 = scmp.ne.s32.totalorder %s63, %s77
      %p79 = scmp.eq.s32.totalorder %s18, 0
      %p80 = por %p78, %p79
      %s82 = sadd.s32 %s81, 1
      %p85 = scmp.eq.s32.totalorder %s12, 1
      %p86 = scmp.ne.s32.totalorder %s81, %s83
      %p87 = scmp.eq.s32.totalorder %s12, 0
      %p88 = por %p86, %p87
      %p89 = scmp.ne.s32.totalorder %s81, %s83
      %p90 = scmp.eq.s32.totalorder %s17, 1
      %p91 = por %p89, %p90
      %p92 = scmp.ne.s32.totalorder %s83, %s84
      %p93 = scmp.eq.s32.totalorder %s17, 0
      %p94 = por %p92, %p93
      %p95 = scmp.ne.s32.totalorder %s83, %s84
      %p96 = scmp.eq.s32.totalorder %s18, 1
      %p97 = por %p95, %p96
      %p99 = scmp.ne.s32.totalorder %s84, %s98
      %p100 = scmp.eq.s32.totalorder %s18, 0
      %p101 = por %p99, %p100
      %s102 = ssub.s32 %s19, %s31
      %s103 = ssub.s32 %s20, %s27
      %s104 = sor.u32 %s102, %s103
      %p105 = scmp.eq.s32.totalorder %s104, 0
      %s107 = sadd.s32 %s106, 1
      %s108 = scalar_select %p105, %s106, %s107
      %p111 = pneg %p105
      %p112 = scmp.eq.s32.totalorder %s12, 1
      %p113 = por %p111, %p112
      %p114 = scmp.ne.s32.totalorder %s106, %s109
      %p115 = scmp.eq.s32.totalorder %s12, 0
      %p116 = por %p114, %p115
      %p117 = scmp.ne.s32.totalorder %s106, %s109
      %p118 = scmp.eq.s32.totalorder %s17, 1
      %p119 = por %p117, %p118
      %p120 = scmp.ne.s32.totalorder %s109, %s110
      %p121 = scmp.eq.s32.totalorder %s17, 0
      %p122 = por %p120, %p121
      %p123 = scmp.ne.s32.totalorder %s109, %s110
      %p124 = scmp.eq.s32.totalorder %s18, 1
      %p125 = por %p123, %p124
      %p127 = scmp.ne.s32.totalorder %s110, %s126
      %p128 = scmp.eq.s32.totalorder %s18, 0
      %p129 = por %p127, %p128
      %p130 = scmp.le.s32.totalorder 1, %s12
      %p131 = scmp.lt.s32.totalorder %s12, 3
      %p132 = pnand %p130, %p131
      %p133 = pneg %p132
      // Predicated region
      $region9: #{tpu_custom_call.1} parent=5 // pred_check
        _
      $region10: #{tpu_custom_call.1} parent=5 // pred_check_branch
        %135 = sbr.rel (%p132) target = $region12
      $region11: #{tpu_custom_call.1} parent=5 // pred_region
        %s136 = ssub.s32 %s12, 1
        // Predicated region
        $region13: #{tpu_custom_call.1} parent=11 // pred_check
          %p137 = pneg %p73
        $region14: #{tpu_custom_call.1} parent=11 // pred_check_branch
          %139 = sbr.rel (%p137) target = $region16
        $region15: #{tpu_custom_call.1} parent=11 // pred_region
          _
        $region16: #{tpu_custom_call.1} parent=11 // pred_fallthru
          _
        // Predicated region
        $region17: #{tpu_custom_call.1} parent=11 // pred_check
          %p140 = pneg %p94
        $region18: #{tpu_custom_call.1} parent=11 // pred_check_branch
          %142 = sbr.rel (%p140) target = $region20
        $region19: #{tpu_custom_call.1} parent=11 // pred_region
          _
        $region20: #{tpu_custom_call.1} parent=11 // pred_fallthru
          _
      $region12: #{tpu_custom_call.1} parent=5 // pred_fallthru
        _
      %p143 = scmp.lt.s32.totalorder %s12, 2
      // Predicated region
      $region21: #{tpu_custom_call.1} parent=5 // pred_check
        %p144 = pneg %p143
      $region22: #{tpu_custom_call.1} parent=5 // pred_check_branch
        %146 = sbr.rel (%p144) target = $region24
      $region23: #{tpu_custom_call.1} parent=5 // pred_region
        // Predicated region
        $region25: #{tpu_custom_call.1} parent=23 // pred_check
          %p147 = pneg %p46
        $region26: #{tpu_custom_call.1} parent=23 // pred_check_branch
          %149 = sbr.rel (%p147) target = $region28
        $region27: #{tpu_custom_call.1} parent=23 // pred_region
          %p150 = scmp.lt.s32.totalorder %s19, 1
          %s151 = scalar_select %p150, %s19, 1
          %p152 = scmp.lt.s32.totalorder %s20, 0
          %s153 = scalar_select %p152, %s20, 0
          %s154 = smul.addr %s153, 4
          %s155 = smul.addr %s151, 4
          %s156 = sadd.s32 %s154, %s155
          %s157 = smul.addr %s156, 2
          %s158 = scalar_lea.vmem %s0, %s157
        $region28: #{tpu_custom_call.1} parent=23 // pred_fallthru
          _
      $region24: #{tpu_custom_call.1} parent=5 // pred_fallthru
        _
      %p159 = scmp.le.s32.totalorder 1, %s12
      %p160 = scmp.lt.s32.totalorder %s12, 3
      %p161 = pnand %p159, %p160
      %p162 = pneg %p161
      // Predicated region
      $region29: #{tpu_custom_call.1} parent=5 // pred_check
        _
      $region30: #{tpu_custom_call.1} parent=5 // pred_check_branch
        %164 = sbr.rel (%p161) target = $region32
      $region31: #{tpu_custom_call.1} parent=5 // pred_region
        %s165 = ssub.s32 %s12, 1
        %p166 = scmp.lt.s32.totalorder %s21, 1
        %s167 = scalar_select %p166, %s21, 1
        %p168 = scmp.lt.s32.totalorder %s22, 0
        %s169 = scalar_select %p168, %s22, 0
        %s170 = smul.addr %s169, 4
        %s171 = smul.addr %s167, 4
        %s172 = sadd.s32 %s170, %s171
        %s173 = smul.addr %s172, 2
        %s174 = scalar_lea.vmem %s0, %s173
        %p175 = pneg %p52
        %p176 = pneg %p49
        %p177 = pneg %p73
        %p178 = pneg %p70
        %p179 = pneg %p94
        %p180 = pneg %p91
        %p181 = pneg %p122
        %p182 = pneg %p119
        %s183 = sand.u32 %s109, 1
        %s184 = scalar_lea.sflag [#allocation4], %s183
        %s185 = sand.u32 %s109, 1
        %s186 = smul.addr %s185, 48
        %s187 = scalar_lea.vmem [#allocation3], %s186
        %p188 = scmp.lt.s32.totalorder %s21, 1
        %s189 = scalar_select %p188, %s21, 1
        %p190 = scmp.lt.s32.totalorder %s22, 0
        %s191 = scalar_select %p190, %s22, 0
        %s192 = smul.addr %s191, 4
        %s193 = smul.addr %s189, 4
        %s194 = sadd.s32 %s192, %s193
        %s195 = smul.addr %s194, 2
        %s196 = scalar_lea.vmem %s0, %s195
        %s197 = smul.u32 3, %s22
        %v199 = vld [vmem:[%s196] sm:$0xff]
        %v200 = vld [vmem:[%s1] sm:$0xf]
        %v201 = vld [vmem:[%s1 + $0x4] sm:$0xf]
        %v204 = vunpack.c.l.b16 %v200
        %v205 = vunpack.c.l.b16 %v201
        %v206 = vpack.c.b16 %v205, %v204
        %v208 = vcombine.high %v199, %v199
        %v210 = vunpack.c.l.s4 1983009808
        %v211 = vunpack.c.0.s8 %v210
        %v212 = vlaneseq
        %v213 = vshrl.u32 %v212, 7
        %v214 = vsub.s32 %v211, %v213
        %v215 = vrot.slane %v199, %v214
        %v217 = vunpack.c.l.s4 1983009808
        %v218 = vunpack.c.0.s8 %v217
        %v219 = vlaneseq
        %v220 = vshrl.u32 %v219, 7
        %v221 = vsub.s32 %v218, %v220
        %v222 = vrot.slane %v208, %v221
        %v223 = vcombine.high %v215, %v215
        %v224 = vcombine.high %v222, %v222
        %225 = vrot.lane.b32.xlu0 %v215, 74
        %v226 = vpop.permute.xlu0 %225
        %227 = vrot.lane.b32.xlu0 %v223, 74
        %v228 = vpop.permute.xlu0 %227
        %229 = vrot.lane.b32.xlu0 %v222, 74
        %v230 = vpop.permute.xlu0 %229
        %231 = vrot.lane.b32.xlu0 %v224, 74
        %v232 = vpop.permute.xlu0 %231
        %vm233 = vcmask 605184
        %v234 = vsel %vm233, %v226, %v228
        %v235 = vsel %vm233, %v228, %v230
        %v236 = vsel %vm233, %v230, %v232
        %vm237 = vcmask 31744
        %v239 = vsel %vm237, %v206, 0
        %vm241 = vcmask 1041408
        %v243 = vsel %vm241, %v234, 0
        %v246 = vsel %vm241, %v235, 0
        %v249 = vsel %vm241, %v236, 0
        %251 = vmatprep.subr.bf16.mxu0 %v246
        %252 = vmatpush1.bf16.msra.mxu0 %v243
        %253 = vmatprep.subr.bf16.mxu0 0
        %254 = vmatpush1.bf16.msra.mxu0 0
        %255 = vmatprep.subr.bf16.mxu0 0
        %256 = vmatpush1.bf16.msra.mxu0 0
        %257 = vmatprep.subr.bf16.mxu0 0
        %258 = vmatpush1.bf16.msra.mxu0 0
        %259 = vmatprep.subr.bf16.mxu0 0
        %260 = vmatpush1.bf16.msra.mxu0 0
        %261 = vmatprep.subr.bf16.mxu0 0
        %262 = vmatpush1.bf16.msra.mxu0 0
        %263 = vmatprep.subr.bf16.mxu0 0
        %264 = vmatpush1.bf16.msra.mxu0 0
        %265 = vmatprep.subr.bf16.mxu0 0
        %266 = vmatpush1.bf16.msra.mxu0 0
        %267 = vmatprep.subr.bf16.mxu0 0
        %268 = vmatpush1.bf16.msra.mxu0 0
        %269 = vmatprep.subr.bf16.mxu0 0
        %270 = vmatpush1.bf16.msra.mxu0 0
        %271 = vmatprep.subr.bf16.mxu0 0
        %272 = vmatpush1.bf16.msra.mxu0 0
        %273 = vmatprep.subr.bf16.mxu0 0
        %274 = vmatpush1.bf16.msra.mxu0 0
        %275 = vmatprep.subr.bf16.mxu0 0
        %276 = vmatpush1.bf16.msra.mxu0 0
        %277 = vmatprep.subr.bf16.mxu0 0
        %278 = vmatpush1.bf16.msra.mxu0 0
        %279 = vmatprep.subr.bf16.mxu0 0
        %280 = vmatpush1.bf16.msra.mxu0 0
        %281 = vmatprep.subr.bf16.mxu0 0
        %282 = vmatpush1.bf16.msra.mxu0 0
        %283 = vmatprep.mubr.bf16.mxu0 0
        %284 = vmatmul.mubr.bf16.gmra.mrb[0].mxu0 %v239
        %v285 = vpop.f32.mrb[0].mxu0
        %v286 = vadd.f32 0.0, %v285
        %v287 = vpop.f32.mrb[0].mxu0
        %v288 = vadd.f32 0.0, %v287
        %v289 = vpop.f32.mrb[0].mxu0
        %v290 = vadd.f32 0.0, %v289
        %v291 = vpop.f32.mrb[0].mxu0
        %v292 = vadd.f32 0.0, %v291
        %293 = vdwg.mxu0
        %294 = vmatprep.subr.bf16.mxu0 0
        %295 = vmatpush1.bf16.msra.mxu0 %v249
        %296 = vmatprep.subr.bf16.mxu0 0
        %297 = vmatpush1.bf16.msra.mxu0 0
        %298 = vmatprep.subr.bf16.mxu0 0
        %299 = vmatpush1.bf16.msra.mxu0 0
        %300 = vmatprep.subr.bf16.mxu0 0
        %301 = vmatpush1.bf16.msra.mxu0 0
        %302 = vmatprep.subr.bf16.mxu0 0
        %303 = vmatpush1.bf16.msra.mxu0 0
        %304 = vmatprep.subr.bf16.mxu0 0
        %305 = vmatpush1.bf16.msra.mxu0 0
        %306 = vmatprep.subr.bf16.mxu0 0
        %307 = vmatpush1.bf16.msra.mxu0 0
        %308 = vmatprep.subr.bf16.mxu0 0
        %309 = vmatpush1.bf16.msra.mxu0 0
        %310 = vmatprep.subr.bf16.mxu0 0
        %311 = vmatpush1.bf16.msra.mxu0 0
        %312 = vmatprep.subr.bf16.mxu0 0
        %313 = vmatpush1.bf16.msra.mxu0 0
        %314 = vmatprep.subr.bf16.mxu0 0
        %315 = vmatpush1.bf16.msra.mxu0 0
        %316 = vmatprep.subr.bf16.mxu0 0
        %317 = vmatpush1.bf16.msra.mxu0 0
        %318 = vmatprep.subr.bf16.mxu0 0
        %319 = vmatpush1.bf16.msra.mxu0 0
        %320 = vmatprep.subr.bf16.mxu0 0
        %321 = vmatpush1.bf16.msra.mxu0 0
        %322 = vmatprep.subr.bf16.mxu0 0
        %323 = vmatpush1.bf16.msra.mxu0 0
        %324 = vmatprep.subr.bf16.mxu0 0
        %325 = vmatpush1.bf16.msra.mxu0 0
        %326 = vmatprep.mubr.bf16.mxu0 0
        %327 = vmatmul.mubr.bf16.gmra.mrb[0].mxu0 %v239
        %v328 = vpop.f32.mrb[0].mxu0
        %v329 = vadd.f32 0.0, %v328
        %v330 = vpop.f32.mrb[0].mxu0
        %v331 = vpop.f32.mrb[0].mxu0
        %v332 = vadd.f32 0.0, %v331
        %v333 = vpop.f32.mrb[0].mxu0
        %334 = vdwg.mxu0
        %335 = vst [vmem:[#allocation2] sm:$0xff] %v286
        %336 = vst [vmem:[#allocation2 + $0x8] sm:$0xff] %v288
        %337 = vst [vmem:[#allocation2 + $0x10] sm:$0xff] %v329
        %338 = vst [vmem:[#allocation2 + $0x18] sm:$0xff] %v290
        %339 = vst [vmem:[#allocation2 + $0x20] sm:$0xff] %v292
        %340 = vst [vmem:[#allocation2 + $0x28] sm:$0xff] %v332
        %v341 = vld [vmem:[%s196] sm:$0xff]
        %s342 = scalar_lea.vmem %s1, 8
        %v343 = vld [vmem:[%s342] sm:$0xf]
        %v344 = vld [vmem:[%s342 + $0x4] sm:$0xf]
        %v347 = vunpack.c.l.b16 %v343
        %v348 = vunpack.c.l.b16 %v344
        %v349 = vpack.c.b16 %v348, %v347
        %v351 = vcombine.high %v341, %v341
        %v353 = vunpack.c.l.s4 1983009808
        %v354 = vunpack.c.0.s8 %v353
        %v355 = vlaneseq
        %v356 = vshrl.u32 %v355, 7
        %v357 = vsub.s32 %v354, %v356
        %v358 = vrot.slane %v341, %v357
        %v360 = vunpack.c.l.s4 1983009808
        %v361 = vunpack.c.0.s8 %v360
        %v362 = vlaneseq
        %v363 = vshrl.u32 %v362, 7
        %v364 = vsub.s32 %v361, %v363
        %v365 = vrot.slane %v351, %v364
        %v366 = vcombine.high %v358, %v358
        %v367 = vcombine.high %v365, %v365
        %368 = vrot.lane.b32.xlu0 %v358, 75
        %v369 = vpop.permute.xlu0 %368
        %370 = vrot.lane.b32.xlu0 %v366, 75
        %v371 = vpop.permute.xlu0 %370
        %372 = vrot.lane.b32.xlu0 %v365, 75
        %v373 = vpop.permute.xlu0 %372
        %374 = vrot.lane.b32.xlu0 %v367, 75
        %v375 = vpop.permute.xlu0 %374
        %vm376 = vcmask 613376
        %v377 = vsel %vm376, %v369, %v371
        %v378 = vsel %vm376, %v371, %v373
        %v379 = vsel %vm376, %v373, %v375
        %v381 = vsel %vm237, %v349, 0
        %v384 = vsel %vm241, %v377, 0
        %v387 = vsel %vm241, %v378, 0
        %v390 = vsel %vm241, %v379, 0
        %392 = vmatprep.subr.bf16.mxu0 %v387
        %393 = vmatpush1.bf16.msra.mxu0 %v384
        %394 = vmatprep.subr.bf16.mxu0 0
        %395 = vmatpush1.bf16.msra.mxu0 0
        %396 = vmatprep.subr.bf16.mxu0 0
        %397 = vmatpush1.bf16.msra.mxu0 0
        %398 = vmatprep.subr.bf16.mxu0 0
        %399 = vmatpush1.bf16.msra.mxu0 0
        %400 = vmatprep.subr.bf16.mxu0 0
        %401 = vmatpush1.bf16.msra.mxu0 0
        %402 = vmatprep.subr.bf16.mxu0 0
        %403 = vmatpush1.bf16.msra.mxu0 0
        %404 = vmatprep.subr.bf16.mxu0 0
        %405 = vmatpush1.bf16.msra.mxu0 0
        %406 = vmatprep.subr.bf16.mxu0 0
        %407 = vmatpush1.bf16.msra.mxu0 0
        %408 = vmatprep.subr.bf16.mxu0 0
        %409 = vmatpush1.bf16.msra.mxu0 0
        %410 = vmatprep.subr.bf16.mxu0 0
        %411 = vmatpush1.bf16.msra.mxu0 0
        %412 = vmatprep.subr.bf16.mxu0 0
        %413 = vmatpush1.bf16.msra.mxu0 0
        %414 = vmatprep.subr.bf16.mxu0 0
        %415 = vmatpush1.bf16.msra.mxu0 0
        %416 = vmatprep.subr.bf16.mxu0 0
        %417 = vmatpush1.bf16.msra.mxu0 0
        %418 = vmatprep.subr.bf16.mxu0 0
        %419 = vmatpush1.bf16.msra.mxu0 0
        %420 = vmatprep.subr.bf16.mxu0 0
        %421 = vmatpush1.bf16.msra.mxu0 0
        %422 = vmatprep.subr.bf16.mxu0 0
        %423 = vmatpush1.bf16.msra.mxu0 0
        %424 = vmatprep.mubr.bf16.mxu0 0
        %425 = vmatmul.mubr.bf16.gmra.mrb[0].mxu0 %v381
        %v426 = vpop.f32.mrb[0].mxu0
        %v427 = vadd.f32 0.0, %v426
        %v428 = vpop.f32.mrb[0].mxu0
        %v429 = vadd.f32 0.0, %v428
        %v430 = vpop.f32.mrb[0].mxu0
        %v431 = vadd.f32 0.0, %v430
        %v432 = vpop.f32.mrb[0].mxu0
        %v433 = vadd.f32 0.0, %v432
        %434 = vdwg.mxu0
        %435 = vmatprep.subr.bf16.mxu0 0
        %436 = vmatpush1.bf16.msra.mxu0 %v390
        %437 = vmatprep.subr.bf16.mxu0 0
        %438 = vmatpush1.bf16.msra.mxu0 0
        %439 = vmatprep.subr.bf16.mxu0 0
        %440 = vmatpush1.bf16.msra.mxu0 0
        %441 = vmatprep.subr.bf16.mxu0 0
        %442 = vmatpush1.bf16.msra.mxu0 0
        %443 = vmatprep.subr.bf16.mxu0 0
        %444 = vmatpush1.bf16.msra.mxu0 0
        %445 = vmatprep.subr.bf16.mxu0 0
        %446 = vmatpush1.bf16.msra.mxu0 0
        %447 = vmatprep.subr.bf16.mxu0 0
        %448 = vmatpush1.bf16.msra.mxu0 0
        %449 = vmatprep.subr.bf16.mxu0 0
        %450 = vmatpush1.bf16.msra.mxu0 0
        %451 = vmatprep.subr.bf16.mxu0 0
        %452 = vmatpush1.bf16.msra.mxu0 0
        %453 = vmatprep.subr.bf16.mxu0 0
        %454 = vmatpush1.bf16.msra.mxu0 0
        %455 = vmatprep.subr.bf16.mxu0 0
        %456 = vmatpush1.bf16.msra.mxu0 0
        %457 = vmatprep.subr.bf16.mxu0 0
        %458 = vmatpush1.bf16.msra.mxu0 0
        %459 = vmatprep.subr.bf16.mxu0 0
        %460 = vmatpush1.bf16.msra.mxu0 0
        %461 = vmatprep.subr.bf16.mxu0 0
        %462 = vmatpush1.bf16.msra.mxu0 0
        %463 = vmatprep.subr.bf16.mxu0 0
        %464 = vmatpush1.bf16.msra.mxu0 0
        %465 = vmatprep.subr.bf16.mxu0 0
        %466 = vmatpush1.bf16.msra.mxu0 0
        %467 = vmatprep.mubr.bf16.mxu0 0
        %468 = vmatmul.mubr.bf16.gmra.mrb[0].mxu0 %v381
        %v469 = vpop.f32.mrb[0].mxu0
        %v470 = vadd.f32 0.0, %v469
        %v471 = vpop.f32.mrb[0].mxu0
        %v472 = vpop.f32.mrb[0].mxu0
        %v473 = vadd.f32 0.0, %v472
        %v474 = vpop.f32.mrb[0].mxu0
        %475 = vdwg.mxu0
        %v476 = vld [vmem:[#allocation2] sm:$0xff]
        %v477 = vld [vmem:[#allocation2 + $0x8] sm:$0xff]
        %v478 = vld [vmem:[#allocation2 + $0x10] sm:$0xff]
        %v479 = vld [vmem:[#allocation2 + $0x18] sm:$0xff]
        %v480 = vld [vmem:[#allocation2 + $0x20] sm:$0xff]
        %v481 = vld [vmem:[#allocation2 + $0x28] sm:$0xff]
        %v482 = vadd.f32 %v476, %v427
        %v483 = vadd.f32 %v477, %v429
        %v484 = vadd.f32 %v478, %v470
        %v485 = vadd.f32 %v479, %v431
        %v486 = vadd.f32 %v480, %v433
        %v487 = vadd.f32 %v481, %v473
        %488 = vst [vmem:[#allocation2] sm:$0xff] %v482
        %489 = vst [vmem:[#allocation2 + $0x8] sm:$0xff] %v483
        %490 = vst [vmem:[#allocation2 + $0x10] sm:$0xff] %v484
        %491 = vst [vmem:[#allocation2 + $0x18] sm:$0xff] %v485
        %492 = vst [vmem:[#allocation2 + $0x20] sm:$0xff] %v486
        %493 = vst [vmem:[#allocation2 + $0x28] sm:$0xff] %v487
        %v494 = vld [vmem:[%s196] sm:$0xff]
        %s495 = scalar_lea.vmem %s1, 16
        %v496 = vld [vmem:[%s495] sm:$0xf]
        %v497 = vld [vmem:[%s495 + $0x4] sm:$0xf]
        %v500 = vunpack.c.l.b16 %v496
        %v501 = vunpack.c.l.b16 %v497
        %v502 = vpack.c.b16 %v501, %v500
        %v504 = vcombine.high %v494, %v494
        %v506 = vunpack.c.l.s4 1983009808
        %v507 = vunpack.c.0.s8 %v506
        %v508 = vlaneseq
        %v509 = vshrl.u32 %v508, 7
        %v510 = vsub.s32 %v507, %v509
        %v511 = vrot.slane %v494, %v510
        %v513 = vunpack.c.l.s4 1983009808
        %v514 = vunpack.c.0.s8 %v513
        %v515 = vlaneseq
        %v516 = vshrl.u32 %v515, 7
        %v517 = vsub.s32 %v514, %v516
        %v518 = vrot.slane %v504, %v517
        %v519 = vcombine.high %v511, %v511
        %v520 = vcombine.high %v518, %v518
        %521 = vrot.lane.b32.xlu0 %v511, 76
        %v522 = vpop.permute.xlu0 %521
        %523 = vrot.lane.b32.xlu0 %v519, 76
        %v524 = vpop.permute.xlu0 %523
        %525 = vrot.lane.b32.xlu0 %v518, 76
        %v526 = vpop.permute.xlu0 %525
        %527 = vrot.lane.b32.xlu0 %v520, 76
        %v528 = vpop.permute.xlu0 %527
        %vm529 = vcmask 621568
        %v530 = vsel %vm529, %v522, %v524
        %v531 = vsel %vm529, %v524, %v526
        %v532 = vsel %vm529, %v526, %v528
        %v534 = vsel %vm237, %v502, 0
        %v537 = vsel %vm241, %v530, 0
        %v540 = vsel %vm241, %v531, 0
        %v543 = vsel %vm241, %v532, 0
        %545 = vmatprep.subr.bf16.mxu0 %v540
        %546 = vmatpush1.bf16.msra.mxu0 %v537
        %547 = vmatprep.subr.bf16.mxu0 0
        %548 = vmatpush1.bf16.msra.mxu0 0
        %549 = vmatprep.subr.bf16.mxu0 0
        %550 = vmatpush1.bf16.msra.mxu0 0
        %551 = vmatprep.subr.bf16.mxu0 0
        %552 = vmatpush1.bf16.msra.mxu0 0
        %553 = vmatprep.subr.bf16.mxu0 0
        %554 = vmatpush1.bf16.msra.mxu0 0
        %555 = vmatprep.subr.bf16.mxu0 0
        %556 = vmatpush1.bf16.msra.mxu0 0
        %557 = vmatprep.subr.bf16.mxu0 0
        %558 = vmatpush1.bf16.msra.mxu0 0
        %559 = vmatprep.subr.bf16.mxu0 0
        %560 = vmatpush1.bf16.msra.mxu0 0
        %561 = vmatprep.subr.bf16.mxu0 0
        %562 = vmatpush1.bf16.msra.mxu0 0
        %563 = vmatprep.subr.bf16.mxu0 0
        %564 = vmatpush1.bf16.msra.mxu0 0
        %565 = vmatprep.subr.bf16.mxu0 0
        %566 = vmatpush1.bf16.msra.mxu0 0
        %567 = vmatprep.subr.bf16.mxu0 0
        %568 = vmatpush1.bf16.msra.mxu0 0
        %569 = vmatprep.subr.bf16.mxu0 0
        %570 = vmatpush1.bf16.msra.mxu0 0
        %571 = vmatprep.subr.bf16.mxu0 0
        %572 = vmatpush1.bf16.msra.mxu0 0
        %573 = vmatprep.subr.bf16.mxu0 0
        %574 = vmatpush1.bf16.msra.mxu0 0
        %575 = vmatprep.subr.bf16.mxu0 0
        %576 = vmatpush1.bf16.msra.mxu0 0
        %577 = vmatprep.mubr.bf16.mxu0 0
        %578 = vmatmul.mubr.bf16.gmra.mrb[0].mxu0 %v534
        %v579 = vpop.f32.mrb[0].mxu0
        %v580 = vadd.f32 0.0, %v579
        %v581 = vpop.f32.mrb[0].mxu0
        %v582 = vadd.f32 0.0, %v581
        %v583 = vpop.f32.mrb[0].mxu0
        %v584 = vadd.f32 0.0, %v583
        %v585 = vpop.f32.mrb[0].mxu0
        %v586 = vadd.f32 0.0, %v585
        %587 = vdwg.mxu0
        %588 = vmatprep.subr.bf16.mxu0 0
        %589 = vmatpush1.bf16.msra.mxu0 %v543
        %590 = vmatprep.subr.bf16.mxu0 0
        %591 = vmatpush1.bf16.msra.mxu0 0
        %592 = vmatprep.subr.bf16.mxu0 0
        %593 = vmatpush1.bf16.msra.mxu0 0
        %594 = vmatprep.subr.bf16.mxu0 0
        %595 = vmatpush1.bf16.msra.mxu0 0
        %596 = vmatprep.subr.bf16.mxu0 0
        %597 = vmatpush1.bf16.msra.mxu0 0
        %598 = vmatprep.subr.bf16.mxu0 0
        %599 = vmatpush1.bf16.msra.mxu0 0
        %600 = vmatprep.subr.bf16.mxu0 0
        %601 = vmatpush1.bf16.msra.mxu0 0
        %602 = vmatprep.subr.bf16.mxu0 0
        %603 = vmatpush1.bf16.msra.mxu0 0
        %604 = vmatprep.subr.bf16.mxu0 0
        %605 = vmatpush1.bf16.msra.mxu0 0
        %606 = vmatprep.subr.bf16.mxu0 0
        %607 = vmatpush1.bf16.msra.mxu0 0
        %608 = vmatprep.subr.bf16.mxu0 0
        %609 = vmatpush1.bf16.msra.mxu0 0
        %610 = vmatprep.subr.bf16.mxu0 0
        %611 = vmatpush1.bf16.msra.mxu0 0
        %612 = vmatprep.subr.bf16.mxu0 0
        %613 = vmatpush1.bf16.msra.mxu0 0
        %614 = vmatprep.subr.bf16.mxu0 0
        %615 = vmatpush1.bf16.msra.mxu0 0
        %616 = vmatprep.subr.bf16.mxu0 0
        %617 = vmatpush1.bf16.msra.mxu0 0
        %618 = vmatprep.subr.bf16.mxu0 0
        %619 = vmatpush1.bf16.msra.mxu0 0
        %620 = vmatprep.mubr.bf16.mxu0 0
        %621 = vmatmul.mubr.bf16.gmra.mrb[0].mxu0 %v534
        %v622 = vpop.f32.mrb[0].mxu0
        %v623 = vadd.f32 0.0, %v622
        %v624 = vpop.f32.mrb[0].mxu0
        %v625 = vpop.f32.mrb[0].mxu0
        %v626 = vadd.f32 0.0, %v625
        %v627 = vpop.f32.mrb[0].mxu0
        %628 = vdwg.mxu0
        %v629 = vld [vmem:[#allocation2] sm:$0xff]
        %v630 = vld [vmem:[#allocation2 + $0x8] sm:$0xff]
        %v631 = vld [vmem:[#allocation2 + $0x10] sm:$0xff]
        %v632 = vld [vmem:[#allocation2 + $0x18] sm:$0xff]
        %v633 = vld [vmem:[#allocation2 + $0x20] sm:$0xff]
        %v634 = vld [vmem:[#allocation2 + $0x28] sm:$0xff]
        %v635 = vadd.f32 %v629, %v580
        %v636 = vadd.f32 %v630, %v582
        %v637 = vadd.f32 %v631, %v623
        %v638 = vadd.f32 %v632, %v584
        %v639 = vadd.f32 %v633, %v586
        %v640 = vadd.f32 %v634, %v626
        %641 = vst [vmem:[#allocation2] sm:$0xff] %v635
        %642 = vst [vmem:[#allocation2 + $0x8] sm:$0xff] %v636
        %643 = vst [vmem:[#allocation2 + $0x10] sm:$0xff] %v637
        %644 = vst [vmem:[#allocation2 + $0x18] sm:$0xff] %v638
        %645 = vst [vmem:[#allocation2 + $0x20] sm:$0xff] %v639
        %646 = vst [vmem:[#allocation2 + $0x28] sm:$0xff] %v640
        %v647 = vld [vmem:[%s196] sm:$0xff]
        %s648 = scalar_lea.vmem %s1, 24
        %v649 = vld [vmem:[%s648] sm:$0xf]
        %v650 = vld [vmem:[%s648 + $0x4] sm:$0xf]
        %v653 = vunpack.c.l.b16 %v649
        %v654 = vunpack.c.l.b16 %v650
        %v655 = vpack.c.b16 %v654, %v653
        %v657 = vcombine.high %v647, %v647
        %v659 = vunpack.c.l.s4 1983009808
        %v660 = vunpack.c.0.s8 %v659
        %v661 = vlaneseq
        %v662 = vshrl.u32 %v661, 7
        %v663 = vsub.s32 %v660, %v662
        %v664 = vrot.slane %v647, %v663
        %v666 = vunpack.c.l.s4 1983009808
        %v667 = vunpack.c.0.s8 %v666
        %v668 = vlaneseq
        %v669 = vshrl.u32 %v668, 7
        %v670 = vsub.s32 %v667, %v669
        %v671 = vrot.slane %v657, %v670
        %v672 = vcombine.high %v664, %v664
        %v673 = vcombine.high %v671, %v671
        %674 = vrot.lane.b32.xlu0 %v664, 92
        %v675 = vpop.permute.xlu0 %674
        %676 = vrot.lane.b32.xlu0 %v672, 92
        %v677 = vpop.permute.xlu0 %676
        %678 = vrot.lane.b32.xlu0 %v671, 92
        %v679 = vpop.permute.xlu0 %678
        %680 = vrot.lane.b32.xlu0 %v673, 92
        %v681 = vpop.permute.xlu0 %680
        %vm682 = vcmask 752640
        %v683 = vsel %vm682, %v675, %v677
        %v684 = vsel %vm682, %v677, %v679
        %v685 = vsel %vm682, %v679, %v681
        %v687 = vsel %vm237, %v655, 0
        %v690 = vsel %vm241, %v683, 0
        %v693 = vsel %vm241, %v684, 0
        %v696 = vsel %vm241, %v685, 0
        %698 = vmatprep.subr.bf16.mxu0 %v693
        %699 = vmatpush1.bf16.msra.mxu0 %v690
        %700 = vmatprep.subr.bf16.mxu0 0
        %701 = vmatpush1.bf16.msra.mxu0 0
        %702 = vmatprep.subr.bf16.mxu0 0
        %703 = vmatpush1.bf16.msra.mxu0 0
        %704 = vmatprep.subr.bf16.mxu0 0
        %705 = vmatpush1.bf16.msra.mxu0 0
        %706 = vmatprep.subr.bf16.mxu0 0
        %707 = vmatpush1.bf16.msra.mxu0 0
        %708 = vmatprep.subr.bf16.mxu0 0
        %709 = vmatpush1.bf16.msra.mxu0 0
        %710 = vmatprep.subr.bf16.mxu0 0
        %711 = vmatpush1.bf16.msra.mxu0 0
        %712 = vmatprep.subr.bf16.mxu0 0
        %713 = vmatpush1.bf16.msra.mxu0 0
        %714 = vmatprep.subr.bf16.mxu0 0
        %715 = vmatpush1.bf16.msra.mxu0 0
        %716 = vmatprep.subr.bf16.mxu0 0
        %717 = vmatpush1.bf16.msra.mxu0 0
        %718 = vmatprep.subr.bf16.mxu0 0
        %719 = vmatpush1.bf16.msra.mxu0 0
        %720 = vmatprep.subr.bf16.mxu0 0
        %721 = vmatpush1.bf16.msra.mxu0 0
        %722 = vmatprep.subr.bf16.mxu0 0
        %723 = vmatpush1.bf16.msra.mxu0 0
        %724 = vmatprep.subr.bf16.mxu0 0
        %725 = vmatpush1.bf16.msra.mxu0 0
        %726 = vmatprep.subr.bf16.mxu0 0
        %727 = vmatpush1.bf16.msra.mxu0 0
        %728 = vmatprep.subr.bf16.mxu0 0
        %729 = vmatpush1.bf16.msra.mxu0 0
        %730 = vmatprep.mubr.bf16.mxu0 0
        %731 = vmatmul.mubr.bf16.gmra.mrb[0].mxu0 %v687
        %v732 = vpop.f32.mrb[0].mxu0
        %v733 = vadd.f32 0.0, %v732
        %v734 = vpop.f32.mrb[0].mxu0
        %v735 = vadd.f32 0.0, %v734
        %v736 = vpop.f32.mrb[0].mxu0
        %v737 = vadd.f32 0.0, %v736
        %v738 = vpop.f32.mrb[0].mxu0
        %v739 = vadd.f32 0.0, %v738
        %740 = vdwg.mxu0
        %741 = vmatprep.subr.bf16.mxu0 0
        %742 = vmatpush1.bf16.msra.mxu0 %v696
        %743 = vmatprep.subr.bf16.mxu0 0
        %744 = vmatpush1.bf16.msra.mxu0 0
        %745 = vmatprep.subr.bf16.mxu0 0
        %746 = vmatpush1.bf16.msra.mxu0 0
        %747 = vmatprep.subr.bf16.mxu0 0
        %748 = vmatpush1.bf16.msra.mxu0 0
        %749 = vmatprep.subr.bf16.mxu0 0
        %750 = vmatpush1.bf16.msra.mxu0 0
        %751 = vmatprep.subr.bf16.mxu0 0
        %752 = vmatpush1.bf16.msra.mxu0 0
        %753 = vmatprep.subr.bf16.mxu0 0
        %754 = vmatpush1.bf16.msra.mxu0 0
        %755 = vmatprep.subr.bf16.mxu0 0
        %756 = vmatpush1.bf16.msra.mxu0 0
        %757 = vmatprep.subr.bf16.mxu0 0
        %758 = vmatpush1.bf16.msra.mxu0 0
        %759 = vmatprep.subr.bf16.mxu0 0
        %760 = vmatpush1.bf16.msra.mxu0 0
        %761 = vmatprep.subr.bf16.mxu0 0
        %762 = vmatpush1.bf16.msra.mxu0 0
        %763 = vmatprep.subr.bf16.mxu0 0
        %764 = vmatpush1.bf16.msra.mxu0 0
        %765 = vmatprep.subr.bf16.mxu0 0
        %766 = vmatpush1.bf16.msra.mxu0 0
        %767 = vmatprep.subr.bf16.mxu0 0
        %768 = vmatpush1.bf16.msra.mxu0 0
        %769 = vmatprep.subr.bf16.mxu0 0
        %770 = vmatpush1.bf16.msra.mxu0 0
        %771 = vmatprep.subr.bf16.mxu0 0
        %772 = vmatpush1.bf16.msra.mxu0 0
        %773 = vmatprep.mubr.bf16.mxu0 0
        %774 = vmatmul.mubr.bf16.gmra.mrb[0].mxu0 %v687
        %v775 = vpop.f32.mrb[0].mxu0
        %v776 = vadd.f32 0.0, %v775
        %v777 = vpop.f32.mrb[0].mxu0
        %v778 = vpop.f32.mrb[0].mxu0
        %v779 = vadd.f32 0.0, %v778
        %v780 = vpop.f32.mrb[0].mxu0
        %781 = vdwg.mxu0
        %v782 = vld [vmem:[#allocation2] sm:$0xff]
        %v783 = vld [vmem:[#allocation2 + $0x8] sm:$0xff]
        %v784 = vld [vmem:[#allocation2 + $0x10] sm:$0xff]
        %v785 = vld [vmem:[#allocation2 + $0x18] sm:$0xff]
        %v786 = vld [vmem:[#allocation2 + $0x20] sm:$0xff]
        %v787 = vld [vmem:[#allocation2 + $0x28] sm:$0xff]
        %v788 = vadd.f32 %v782, %v733
        %v789 = vadd.f32 %v783, %v735
        %v790 = vadd.f32 %v784, %v776
        %v791 = vadd.f32 %v785, %v737
        %v792 = vadd.f32 %v786, %v739
        %v793 = vadd.f32 %v787, %v779
        %794 = vst [vmem:[#allocation2] sm:$0xff] %v788
        %795 = vst [vmem:[#allocation2 + $0x8] sm:$0xff] %v789
        %796 = vst [vmem:[#allocation2 + $0x10] sm:$0xff] %v790
        %797 = vst [vmem:[#allocation2 + $0x18] sm:$0xff] %v791
        %798 = vst [vmem:[#allocation2 + $0x20] sm:$0xff] %v792
        %799 = vst [vmem:[#allocation2 + $0x28] sm:$0xff] %v793
        %v800 = vld [vmem:[%s196] sm:$0xff]
        %s801 = scalar_lea.vmem %s1, 32
        %v802 = vld [vmem:[%s801] sm:$0xf]
        %v803 = vld [vmem:[%s801 + $0x4] sm:$0xf]
        %v806 = vunpack.c.l.b16 %v802
        %v807 = vunpack.c.l.b16 %v803
        %v808 = vpack.c.b16 %v807, %v806
        %v810 = vcombine.high %v800, %v800
        %v812 = vunpack.c.l.s4 1983009808
        %v813 = vunpack.c.0.s8 %v812
        %v814 = vlaneseq
        %v815 = vshrl.u32 %v814, 7
        %v816 = vsub.s32 %v813, %v815
        %v817 = vrot.slane %v800, %v816
        %v819 = vunpack.c.l.s4 1983009808
        %v820 = vunpack.c.0.s8 %v819
        %v821 = vlaneseq
        %v822 = vshrl.u32 %v821, 7
        %v823 = vsub.s32 %v820, %v822
        %v824 = vrot.slane %v810, %v823
        %v825 = vcombine.high %v817, %v817
        %v826 = vcombine.high %v824, %v824
        %827 = vrot.lane.b32.xlu0 %v817, 93
        %v828 = vpop.permute.xlu0 %827
        %829 = vrot.lane.b32.xlu0 %v825, 93
        %v830 = vpop.permute.xlu0 %829
        %831 = vrot.lane.b32.xlu0 %v824, 93
        %v832 = vpop.permute.xlu0 %831
        %833 = vrot.lane.b32.xlu0 %v826, 93
        %v834 = vpop.permute.xlu0 %833
        %vm835 = vcmask 760832
        %v836 = vsel %vm835, %v828, %v830
        %v837 = vsel %vm835, %v830, %v832
        %v838 = vsel %vm835, %v832, %v834
        %v840 = vsel %vm237, %v808, 0
        %v843 = vsel %vm241, %v836, 0
        %v846 = vsel %vm241, %v837, 0
        %v849 = vsel %vm241, %v838, 0
        %851 = vmatprep.subr.bf16.mxu0 %v846
        %852 = vmatpush1.bf16.msra.mxu0 %v843
        %853 = vmatprep.subr.bf16.mxu0 0
        %854 = vmatpush1.bf16.msra.mxu0 0
        %855 = vmatprep.subr.bf16.mxu0 0
        %856 = vmatpush1.bf16.msra.mxu0 0
        %857 = vmatprep.subr.bf16.mxu0 0
        %858 = vmatpush1.bf16.msra.mxu0 0
        %859 = vmatprep.subr.bf16.mxu0 0
        %860 = vmatpush1.bf16.msra.mxu0 0
        %861 = vmatprep.subr.bf16.mxu0 0
        %862 = vmatpush1.bf16.msra.mxu0 0
        %863 = vmatprep.subr.bf16.mxu0 0
        %864 = vmatpush1.bf16.msra.mxu0 0
        %865 = vmatprep.subr.bf16.mxu0 0
        %866 = vmatpush1.bf16.msra.mxu0 0
        %867 = vmatprep.subr.bf16.mxu0 0
        %868 = vmatpush1.bf16.msra.mxu0 0
        %869 = vmatprep.subr.bf16.mxu0 0
        %870 = vmatpush1.bf16.msra.mxu0 0
        %871 = vmatprep.subr.bf16.mxu0 0
        %872 = vmatpush1.bf16.msra.mxu0 0
        %873 = vmatprep.subr.bf16.mxu0 0
        %874 = vmatpush1.bf16.msra.mxu0 0
        %875 = vmatprep.subr.bf16.mxu0 0
        %876 = vmatpush1.bf16.msra.mxu0 0
        %877 = vmatprep.subr.bf16.mxu0 0
        %878 = vmatpush1.bf16.msra.mxu0 0
        %879 = vmatprep.subr.bf16.mxu0 0
        %880 = vmatpush1.bf16.msra.mxu0 0
        %881 = vmatprep.subr.bf16.mxu0 0
        %882 = vmatpush1.bf16.msra.mxu0 0
        %883 = vmatprep.mubr.bf16.mxu0 0
        %884 = vmatmul.mubr.bf16.gmra.mrb[0].mxu0 %v840
        %v885 = vpop.f32.mrb[0].mxu0
        %v886 = vadd.f32 0.0, %v885
        %v887 = vpop.f32.mrb[0].mxu0
        %v888 = vadd.f32 0.0, %v887
        %v889 = vpop.f32.mrb[0].mxu0
        %v890 = vadd.f32 0.0, %v889
        %v891 = vpop.f32.mrb[0].mxu0
        %v892 = vadd.f32 0.0, %v891
        %893 = vdwg.mxu0
        %894 = vmatprep.subr.bf16.mxu0 0
        %895 = vmatpush1.bf16.msra.mxu0 %v849
        %896 = vmatprep.subr.bf16.mxu0 0
        %897 = vmatpush1.bf16.msra.mxu0 0
        %898 = vmatprep.subr.bf16.mxu0 0
        %899 = vmatpush1.bf16.msra.mxu0 0
        %900 = vmatprep.subr.bf16.mxu0 0
        %901 = vmatpush1.bf16.msra.mxu0 0
        %902 = vmatprep.subr.bf16.mxu0 0
        %903 = vmatpush1.bf16.msra.mxu0 0
        %904 = vmatprep.subr.bf16.mxu0 0
        %905 = vmatpush1.bf16.msra.mxu0 0
        %906 = vmatprep.subr.bf16.mxu0 0
        %907 = vmatpush1.bf16.msra.mxu0 0
        %908 = vmatprep.subr.bf16.mxu0 0
        %909 = vmatpush1.bf16.msra.mxu0 0
        %910 = vmatprep.subr.bf16.mxu0 0
        %911 = vmatpush1.bf16.msra.mxu0 0
        %912 = vmatprep.subr.bf16.mxu0 0
        %913 = vmatpush1.bf16.msra.mxu0 0
        %914 = vmatprep.subr.bf16.mxu0 0
        %915 = vmatpush1.bf16.msra.mxu0 0
        %916 = vmatprep.subr.bf16.mxu0 0
        %917 = vmatpush1.bf16.msra.mxu0 0
        %918 = vmatprep.subr.bf16.mxu0 0
        %919 = vmatpush1.bf16.msra.mxu0 0
        %920 = vmatprep.subr.bf16.mxu0 0
        %921 = vmatpush1.bf16.msra.mxu0 0
        %922 = vmatprep.subr.bf16.mxu0 0
        %923 = vmatpush1.bf16.msra.mxu0 0
        %924 = vmatprep.subr.bf16.mxu0 0
        %925 = vmatpush1.bf16.msra.mxu0 0
        %926 = vmatprep.mubr.bf16.mxu0 0
        %927 = vmatmul.mubr.bf16.gmra.mrb[0].mxu0 %v840
        %v928 = vpop.f32.mrb[0].mxu0
        %v929 = vadd.f32 0.0, %v928
        %v930 = vpop.f32.mrb[0].mxu0
        %v931 = vpop.f32.mrb[0].mxu0
        %v932 = vadd.f32 0.0, %v931
        %v933 = vpop.f32.mrb[0].mxu0
        %934 = vdwg.mxu0
        %v935 = vld [vmem:[#allocation2] sm:$0xff]
        %v936 = vld [vmem:[#allocation2 + $0x8] sm:$0xff]
        %v937 = vld [vmem:[#allocation2 + $0x10] sm:$0xff]
        %v938 = vld [vmem:[#allocation2 + $0x18] sm:$0xff]
        %v939 = vld [vmem:[#allocation2 + $0x20] sm:$0xff]
        %v940 = vld [vmem:[#allocation2 + $0x28] sm:$0xff]
        %v941 = vadd.f32 %v935, %v886
        %v942 = vadd.f32 %v936, %v888
        %v943 = vadd.f32 %v937, %v929
        %v944 = vadd.f32 %v938, %v890
        %v945 = vadd.f32 %v939, %v892
        %v946 = vadd.f32 %v940, %v932
        %947 = vst [vmem:[#allocation2] sm:$0xff] %v941
        %948 = vst [vmem:[#allocation2 + $0x8] sm:$0xff] %v942
        %949 = vst [vmem:[#allocation2 + $0x10] sm:$0xff] %v943
        %950 = vst [vmem:[#allocation2 + $0x18] sm:$0xff] %v944
        %951 = vst [vmem:[#allocation2 + $0x20] sm:$0xff] %v945
        %952 = vst [vmem:[#allocation2 + $0x28] sm:$0xff] %v946
        %v953 = vld [vmem:[%s196] sm:$0xff]
        %s954 = scalar_lea.vmem %s1, 40
        %v955 = vld [vmem:[%s954] sm:$0xf]
        %v956 = vld [vmem:[%s954 + $0x4] sm:$0xf]
        %v959 = vunpack.c.l.b16 %v955
        %v960 = vunpack.c.l.b16 %v956
        %v961 = vpack.c.b16 %v960, %v959
        %v963 = vcombine.high %v953, %v953
        %v965 = vunpack.c.l.s4 1983009808
        %v966 = vunpack.c.0.s8 %v965
        %v967 = vlaneseq
        %v968 = vshrl.u32 %v967, 7
        %v969 = vsub.s32 %v966, %v968
        %v970 = vrot.slane %v953, %v969
        %v972 = vunpack.c.l.s4 1983009808
        %v973 = vunpack.c.0.s8 %v972
        %v974 = vlaneseq
        %v975 = vshrl.u32 %v974, 7
        %v976 = vsub.s32 %v973, %v975
        %v977 = vrot.slane %v963, %v976
        %v978 = vcombine.high %v970, %v970
        %v979 = vcombine.high %v977, %v977
        %980 = vrot.lane.b32.xlu0 %v970, 94
        %v981 = vpop.permute.xlu0 %980
        %982 = vrot.lane.b32.xlu0 %v978, 94
        %v983 = vpop.permute.xlu0 %982
        %984 = vrot.lane.b32.xlu0 %v977, 94
        %v985 = vpop.permute.xlu0 %984
        %986 = vrot.lane.b32.xlu0 %v979, 94
        %v987 = vpop.permute.xlu0 %986
        %vm988 = vcmask 769024
        %v989 = vsel %vm988, %v981, %v983
        %v990 = vsel %vm988, %v983, %v985
        %v991 = vsel %vm988, %v985, %v987
        %v993 = vsel %vm237, %v961, 0
        %v996 = vsel %vm241, %v989, 0
        %v999 = vsel %vm241, %v990, 0
        %v1002 = vsel %vm241, %v991, 0
        %1004 = vmatprep.subr.bf16.mxu0 %v999
        %1005 = vmatpush1.bf16.msra.mxu0 %v996
        %1006 = vmatprep.subr.bf16.mxu0 0
        %1007 = vmatpush1.bf16.msra.mxu0 0
        %1008 = vmatprep.subr.bf16.mxu0 0
        %1009 = vmatpush1.bf16.msra.mxu0 0
        %1010 = vmatprep.subr.bf16.mxu0 0
        %1011 = vmatpush1.bf16.msra.mxu0 0
        %1012 = vmatprep.subr.bf16.mxu0 0
        %1013 = vmatpush1.bf16.msra.mxu0 0
        %1014 = vmatprep.subr.bf16.mxu0 0
        %1015 = vmatpush1.bf16.msra.mxu0 0
        %1016 = vmatprep.subr.bf16.mxu0 0
        %1017 = vmatpush1.bf16.msra.mxu0 0
        %1018 = vmatprep.subr.bf16.mxu0 0
        %1019 = vmatpush1.bf16.msra.mxu0 0
        %1020 = vmatprep.subr.bf16.mxu0 0
        %1021 = vmatpush1.bf16.msra.mxu0 0
        %1022 = vmatprep.subr.bf16.mxu0 0
        %1023 = vmatpush1.bf16.msra.mxu0 0
        %1024 = vmatprep.subr.bf16.mxu0 0
        %1025 = vmatpush1.bf16.msra.mxu0 0
        %1026 = vmatprep.subr.bf16.mxu0 0
        %1027 = vmatpush1.bf16.msra.mxu0 0
        %1028 = vmatprep.subr.bf16.mxu0 0
        %1029 = vmatpush1.bf16.msra.mxu0 0
        %1030 = vmatprep.subr.bf16.mxu0 0
        %1031 = vmatpush1.bf16.msra.mxu0 0
        %1032 = vmatprep.subr.bf16.mxu0 0
        %1033 = vmatpush1.bf16.msra.mxu0 0
        %1034 = vmatprep.subr.bf16.mxu0 0
        %1035 = vmatpush1.bf16.msra.mxu0 0
        %1036 = vmatprep.mubr.bf16.mxu0 0
        %1037 = vmatmul.mubr.bf16.gmra.mrb[0].mxu0 %v993
        %v1038 = vpop.f32.mrb[0].mxu0
        %v1039 = vadd.f32 0.0, %v1038
        %v1040 = vpop.f32.mrb[0].mxu0
        %v1041 = vadd.f32 0.0, %v1040
        %v1042 = vpop.f32.mrb[0].mxu0
        %v1043 = vadd.f32 0.0, %v1042
        %v1044 = vpop.f32.mrb[0].mxu0
        %v1045 = vadd.f32 0.0, %v1044
        %1046 = vdwg.mxu0
        %1047 = vmatprep.subr.bf16.mxu0 0
        %1048 = vmatpush1.bf16.msra.mxu0 %v1002
        %1049 = vmatprep.subr.bf16.mxu0 0
        %1050 = vmatpush1.bf16.msra.mxu0 0
        %1051 = vmatprep.subr.bf16.mxu0 0
        %1052 = vmatpush1.bf16.msra.mxu0 0
        %1053 = vmatprep.subr.bf16.mxu0 0
        %1054 = vmatpush1.bf16.msra.mxu0 0
        %1055 = vmatprep.subr.bf16.mxu0 0
        %1056 = vmatpush1.bf16.msra.mxu0 0
        %1057 = vmatprep.subr.bf16.mxu0 0
        %1058 = vmatpush1.bf16.msra.mxu0 0
        %1059 = vmatprep.subr.bf16.mxu0 0
        %1060 = vmatpush1.bf16.msra.mxu0 0
        %1061 = vmatprep.subr.bf16.mxu0 0
        %1062 = vmatpush1.bf16.msra.mxu0 0
        %1063 = vmatprep.subr.bf16.mxu0 0
        %1064 = vmatpush1.bf16.msra.mxu0 0
        %1065 = vmatprep.subr.bf16.mxu0 0
        %1066 = vmatpush1.bf16.msra.mxu0 0
        %1067 = vmatprep.subr.bf16.mxu0 0
        %1068 = vmatpush1.bf16.msra.mxu0 0
        %1069 = vmatprep.subr.bf16.mxu0 0
        %1070 = vmatpush1.bf16.msra.mxu0 0
        %1071 = vmatprep.subr.bf16.mxu0 0
        %1072 = vmatpush1.bf16.msra.mxu0 0
        %1073 = vmatprep.subr.bf16.mxu0 0
        %1074 = vmatpush1.bf16.msra.mxu0 0
        %1075 = vmatprep.subr.bf16.mxu0 0
        %1076 = vmatpush1.bf16.msra.mxu0 0
        %1077 = vmatprep.subr.bf16.mxu0 0
        %1078 = vmatpush1.bf16.msra.mxu0 0
        %1079 = vmatprep.mubr.bf16.mxu0 0
        %1080 = vmatmul.mubr.bf16.gmra.mrb[0].mxu0 %v993
        %v1081 = vpop.f32.mrb[0].mxu0
        %v1082 = vadd.f32 0.0, %v1081
        %v1083 = vpop.f32.mrb[0].mxu0
        %v1084 = vpop.f32.mrb[0].mxu0
        %v1085 = vadd.f32 0.0, %v1084
        %v1086 = vpop.f32.mrb[0].mxu0
        %1087 = vdwg.mxu0
        %v1088 = vld [vmem:[#allocation2] sm:$0xff]
        %v1089 = vld [vmem:[#allocation2 + $0x8] sm:$0xff]
        %v1090 = vld [vmem:[#allocation2 + $0x10] sm:$0xff]
        %v1091 = vld [vmem:[#allocation2 + $0x18] sm:$0xff]
        %v1092 = vld [vmem:[#allocation2 + $0x20] sm:$0xff]
        %v1093 = vld [vmem:[#allocation2 + $0x28] sm:$0xff]
        %v1094 = vadd.f32 %v1088, %v1039
        %v1095 = vadd.f32 %v1089, %v1041
        %v1096 = vadd.f32 %v1090, %v1082
        %v1097 = vadd.f32 %v1091, %v1043
        %v1098 = vadd.f32 %v1092, %v1045
        %v1099 = vadd.f32 %v1093, %v1085
        %1100 = vst [vmem:[#allocation2] sm:$0xff] %v1094
        %1101 = vst [vmem:[#allocation2 + $0x8] sm:$0xff] %v1095
        %1102 = vst [vmem:[#allocation2 + $0x10] sm:$0xff] %v1096
        %1103 = vst [vmem:[#allocation2 + $0x18] sm:$0xff] %v1097
        %1104 = vst [vmem:[#allocation2 + $0x20] sm:$0xff] %v1098
        %1105 = vst [vmem:[#allocation2 + $0x28] sm:$0xff] %v1099
        %v1106 = vld [vmem:[%s196] sm:$0xff]
        %s1107 = scalar_lea.vmem %s1, 48
        %v1108 = vld [vmem:[%s1107] sm:$0xf]
        %v1109 = vld [vmem:[%s1107 + $0x4] sm:$0xf]
        %v1112 = vunpack.c.l.b16 %v1108
        %v1113 = vunpack.c.l.b16 %v1109
        %v1114 = vpack.c.b16 %v1113, %v1112
        %v1116 = vcombine.high %v1106, %v1106
        %v1118 = vunpack.c.l.s4 1983009808
        %v1119 = vunpack.c.0.s8 %v1118
        %v1120 = vlaneseq
        %v1121 = vshrl.u32 %v1120, 7
        %v1122 = vsub.s32 %v1119, %v1121
        %v1123 = vrot.slane %v1106, %v1122
        %v1125 = vunpack.c.l.s4 1983009808
        %v1126 = vunpack.c.0.s8 %v1125
        %v1127 = vlaneseq
        %v1128 = vshrl.u32 %v1127, 7
        %v1129 = vsub.s32 %v1126, %v1128
        %v1130 = vrot.slane %v1116, %v1129
        %v1131 = vcombine.high %v1123, %v1123
        %v1132 = vcombine.high %v1130, %v1130
        %1133 = vrot.lane.b32.xlu0 %v1123, 110
        %v1134 = vpop.permute.xlu0 %1133
        %1135 = vrot.lane.b32.xlu0 %v1131, 110
        %v1136 = vpop.permute.xlu0 %1135
        %1137 = vrot.lane.b32.xlu0 %v1130, 110
        %v1138 = vpop.permute.xlu0 %1137
        %1139 = vrot.lane.b32.xlu0 %v1132, 110
        %v1140 = vpop.permute.xlu0 %1139
        %vm1141 = vcmask 900096
        %v1142 = vsel %vm1141, %v1134, %v1136
        %v1143 = vsel %vm1141, %v1136, %v1138
        %v1144 = vsel %vm1141, %v1138, %v1140
        %v1146 = vsel %vm237, %v1114, 0
        %v1149 = vsel %vm241, %v1142, 0
        %v1152 = vsel %vm241, %v1143, 0
        %v1155 = vsel %vm241, %v1144, 0
        %1157 = vmatprep.subr.bf16.mxu0 %v1152
        %1158 = vmatpush1.bf16.msra.mxu0 %v1149
        %1159 = vmatprep.subr.bf16.mxu0 0
        %1160 = vmatpush1.bf16.msra.mxu0 0
        %1161 = vmatprep.subr.bf16.mxu0 0
        %1162 = vmatpush1.bf16.msra.mxu0 0
        %1163 = vmatprep.subr.bf16.mxu0 0
        %1164 = vmatpush1.bf16.msra.mxu0 0
        %1165 = vmatprep.subr.bf16.mxu0 0
        %1166 = vmatpush1.bf16.msra.mxu0 0
        %1167 = vmatprep.subr.bf16.mxu0 0
        %1168 = vmatpush1.bf16.msra.mxu0 0
        %1169 = vmatprep.subr.bf16.mxu0 0
        %1170 = vmatpush1.bf16.msra.mxu0 0
        %1171 = vmatprep.subr.bf16.mxu0 0
        %1172 = vmatpush1.bf16.msra.mxu0 0
        %1173 = vmatprep.subr.bf16.mxu0 0
        %1174 = vmatpush1.bf16.msra.mxu0 0
        %1175 = vmatprep.subr.bf16.mxu0 0
        %1176 = vmatpush1.bf16.msra.mxu0 0
        %1177 = vmatprep.subr.bf16.mxu0 0
        %1178 = vmatpush1.bf16.msra.mxu0 0
        %1179 = vmatprep.subr.bf16.mxu0 0
        %1180 = vmatpush1.bf16.msra.mxu0 0
        %1181 = vmatprep.subr.bf16.mxu0 0
        %1182 = vmatpush1.bf16.msra.mxu0 0
        %1183 = vmatprep.subr.bf16.mxu0 0
        %1184 = vmatpush1.bf16.msra.mxu0 0
        %1185 = vmatprep.subr.bf16.mxu0 0
        %1186 = vmatpush1.bf16.msra.mxu0 0
        %1187 = vmatprep.subr.bf16.mxu0 0
        %1188 = vmatpush1.bf16.msra.mxu0 0
        %1189 = vmatprep.mubr.bf16.mxu0 0
        %1190 = vmatmul.mubr.bf16.gmra.mrb[0].mxu0 %v1146
        %v1191 = vpop.f32.mrb[0].mxu0
        %v1192 = vadd.f32 0.0, %v1191
        %v1193 = vpop.f32.mrb[0].mxu0
        %v1194 = vadd.f32 0.0, %v1193
        %v1195 = vpop.f32.mrb[0].mxu0
        %v1196 = vadd.f32 0.0, %v1195
        %v1197 = vpop.f32.mrb[0].mxu0
        %v1198 = vadd.f32 0.0, %v1197
        %1199 = vdwg.mxu0
        %1200 = vmatprep.subr.bf16.mxu0 0
        %1201 = vmatpush1.bf16.msra.mxu0 %v1155
        %1202 = vmatprep.subr.bf16.mxu0 0
        %1203 = vmatpush1.bf16.msra.mxu0 0
        %1204 = vmatprep.subr.bf16.mxu0 0
        %1205 = vmatpush1.bf16.msra.mxu0 0
        %1206 = vmatprep.subr.bf16.mxu0 0
        %1207 = vmatpush1.bf16.msra.mxu0 0
        %1208 = vmatprep.subr.bf16.mxu0 0
        %1209 = vmatpush1.bf16.msra.mxu0 0
        %1210 = vmatprep.subr.bf16.mxu0 0
        %1211 = vmatpush1.bf16.msra.mxu0 0
        %1212 = vmatprep.subr.bf16.mxu0 0
        %1213 = vmatpush1.bf16.msra.mxu0 0
        %1214 = vmatprep.subr.bf16.mxu0 0
        %1215 = vmatpush1.bf16.msra.mxu0 0
        %1216 = vmatprep.subr.bf16.mxu0 0
        %1217 = vmatpush1.bf16.msra.mxu0 0
        %1218 = vmatprep.subr.bf16.mxu0 0
        %1219 = vmatpush1.bf16.msra.mxu0 0
        %1220 = vmatprep.subr.bf16.mxu0 0
        %1221 = vmatpush1.bf16.msra.mxu0 0
        %1222 = vmatprep.subr.bf16.mxu0 0
        %1223 = vmatpush1.bf16.msra.mxu0 0
        %1224 = vmatprep.subr.bf16.mxu0 0
        %1225 = vmatpush1.bf16.msra.mxu0 0
        %1226 = vmatprep.subr.bf16.mxu0 0
        %1227 = vmatpush1.bf16.msra.mxu0 0
        %1228 = vmatprep.subr.bf16.mxu0 0
        %1229 = vmatpush1.bf16.msra.mxu0 0
        %1230 = vmatprep.subr.bf16.mxu0 0
        %1231 = vmatpush1.bf16.msra.mxu0 0
        %1232 = vmatprep.mubr.bf16.mxu0 0
        %1233 = vmatmul.mubr.bf16.gmra.mrb[0].mxu0 %v1146
        %v1234 = vpop.f32.mrb[0].mxu0
        %v1235 = vadd.f32 0.0, %v1234
        %v1236 = vpop.f32.mrb[0].mxu0
        %v1237 = vpop.f32.mrb[0].mxu0
        %v1238 = vadd.f32 0.0, %v1237
        %v1239 = vpop.f32.mrb[0].mxu0
        %1240 = vdwg.mxu0
        %v1241 = vld [vmem:[#allocation2] sm:$0xff]
        %v1242 = vld [vmem:[#allocation2 + $0x8] sm:$0xff]
        %v1243 = vld [vmem:[#allocation2 + $0x10] sm:$0xff]
        %v1244 = vld [vmem:[#allocation2 + $0x18] sm:$0xff]
        %v1245 = vld [vmem:[#allocation2 + $0x20] sm:$0xff]
        %v1246 = vld [vmem:[#allocation2 + $0x28] sm:$0xff]
        %v1247 = vadd.f32 %v1241, %v1192
        %v1248 = vadd.f32 %v1242, %v1194
        %v1249 = vadd.f32 %v1243, %v1235
        %v1250 = vadd.f32 %v1244, %v1196
        %v1251 = vadd.f32 %v1245, %v1198
        %v1252 = vadd.f32 %v1246, %v1238
        %1253 = vst [vmem:[#allocation2] sm:$0xff] %v1247
        %1254 = vst [vmem:[#allocation2 + $0x8] sm:$0xff] %v1248
        %1255 = vst [vmem:[#allocation2 + $0x10] sm:$0xff] %v1249
        %1256 = vst [vmem:[#allocation2 + $0x18] sm:$0xff] %v1250
        %1257 = vst [vmem:[#allocation2 + $0x20] sm:$0xff] %v1251
        %1258 = vst [vmem:[#allocation2 + $0x28] sm:$0xff] %v1252
        %v1259 = vld [vmem:[%s196] sm:$0xff]
        %s1260 = scalar_lea.vmem %s1, 56
        %v1261 = vld [vmem:[%s1260] sm:$0xf]
        %v1262 = vld [vmem:[%s1260 + $0x4] sm:$0xf]
        %v1265 = vunpack.c.l.b16 %v1261
        %v1266 = vunpack.c.l.b16 %v1262
        %v1267 = vpack.c.b16 %v1266, %v1265
        %v1269 = vcombine.high %v1259, %v1259
        %v1271 = vunpack.c.l.s4 1983009808
        %v1272 = vunpack.c.0.s8 %v1271
        %v1273 = vlaneseq
        %v1274 = vshrl.u32 %v1273, 7
        %v1275 = vsub.s32 %v1272, %v1274
        %v1276 = vrot.slane %v1259, %v1275
        %v1278 = vunpack.c.l.s4 1983009808
        %v1279 = vunpack.c.0.s8 %v1278
        %v1280 = vlaneseq
        %v1281 = vshrl.u32 %v1280, 7
        %v1282 = vsub.s32 %v1279, %v1281
        %v1283 = vrot.slane %v1269, %v1282
        %v1284 = vcombine.high %v1276, %v1276
        %v1285 = vcombine.high %v1283, %v1283
        %1286 = vrot.lane.b32.xlu0 %v1276, 111
        %v1287 = vpop.permute.xlu0 %1286
        %1288 = vrot.lane.b32.xlu0 %v1284, 111
        %v1289 = vpop.permute.xlu0 %1288
        %1290 = vrot.lane.b32.xlu0 %v1283, 111
        %v1291 = vpop.permute.xlu0 %1290
        %1292 = vrot.lane.b32.xlu0 %v1285, 111
        %v1293 = vpop.permute.xlu0 %1292
        %vm1294 = vcmask 908288
        %v1295 = vsel %vm1294, %v1287, %v1289
        %v1296 = vsel %vm1294, %v1289, %v1291
        %v1297 = vsel %vm1294, %v1291, %v1293
        %v1299 = vsel %vm237, %v1267, 0
        %v1302 = vsel %vm241, %v1295, 0
        %v1305 = vsel %vm241, %v1296, 0
        %v1308 = vsel %vm241, %v1297, 0
        %1310 = vmatprep.subr.bf16.mxu0 %v1305
        %1311 = vmatpush1.bf16.msra.mxu0 %v1302
        %1312 = vmatprep.subr.bf16.mxu0 0
        %1313 = vmatpush1.bf16.msra.mxu0 0
        %1314 = vmatprep.subr.bf16.mxu0 0
        %1315 = vmatpush1.bf16.msra.mxu0 0
        %1316 = vmatprep.subr.bf16.mxu0 0
        %1317 = vmatpush1.bf16.msra.mxu0 0
        %1318 = vmatprep.subr.bf16.mxu0 0
        %1319 = vmatpush1.bf16.msra.mxu0 0
        %1320 = vmatprep.subr.bf16.mxu0 0
        %1321 = vmatpush1.bf16.msra.mxu0 0
        %1322 = vmatprep.subr.bf16.mxu0 0
        %1323 = vmatpush1.bf16.msra.mxu0 0
        %1324 = vmatprep.subr.bf16.mxu0 0
        %1325 = vmatpush1.bf16.msra.mxu0 0
        %1326 = vmatprep.subr.bf16.mxu0 0
        %1327 = vmatpush1.bf16.msra.mxu0 0
        %1328 = vmatprep.subr.bf16.mxu0 0
        %1329 = vmatpush1.bf16.msra.mxu0 0
        %1330 = vmatprep.subr.bf16.mxu0 0
        %1331 = vmatpush1.bf16.msra.mxu0 0
        %1332 = vmatprep.subr.bf16.mxu0 0
        %1333 = vmatpush1.bf16.msra.mxu0 0
        %1334 = vmatprep.subr.bf16.mxu0 0
        %1335 = vmatpush1.bf16.msra.mxu0 0
        %1336 = vmatprep.subr.bf16.mxu0 0
        %1337 = vmatpush1.bf16.msra.mxu0 0
        %1338 = vmatprep.subr.bf16.mxu0 0
        %1339 = vmatpush1.bf16.msra.mxu0 0
        %1340 = vmatprep.subr.bf16.mxu0 0
        %1341 = vmatpush1.bf16.msra.mxu0 0
        %1342 = vmatprep.mubr.bf16.mxu0 0
        %1343 = vmatmul.mubr.bf16.gmra.mrb[0].mxu0 %v1299
        %v1344 = vpop.f32.mrb[0].mxu0
        %v1345 = vadd.f32 0.0, %v1344
        %v1346 = vpop.f32.mrb[0].mxu0
        %v1347 = vadd.f32 0.0, %v1346
        %v1348 = vpop.f32.mrb[0].mxu0
        %v1349 = vadd.f32 0.0, %v1348
        %v1350 = vpop.f32.mrb[0].mxu0
        %v1351 = vadd.f32 0.0, %v1350
        %1352 = vdwg.mxu0
        %1353 = vmatprep.subr.bf16.mxu0 0
        %1354 = vmatpush1.bf16.msra.mxu0 %v1308
        %1355 = vmatprep.subr.bf16.mxu0 0
        %1356 = vmatpush1.bf16.msra.mxu0 0
        %1357 = vmatprep.subr.bf16.mxu0 0
        %1358 = vmatpush1.bf16.msra.mxu0 0
        %1359 = vmatprep.subr.bf16.mxu0 0
        %1360 = vmatpush1.bf16.msra.mxu0 0
        %1361 = vmatprep.subr.bf16.mxu0 0
        %1362 = vmatpush1.bf16.msra.mxu0 0
        %1363 = vmatprep.subr.bf16.mxu0 0
        %1364 = vmatpush1.bf16.msra.mxu0 0
        %1365 = vmatprep.subr.bf16.mxu0 0
        %1366 = vmatpush1.bf16.msra.mxu0 0
        %1367 = vmatprep.subr.bf16.mxu0 0
        %1368 = vmatpush1.bf16.msra.mxu0 0
        %1369 = vmatprep.subr.bf16.mxu0 0
        %1370 = vmatpush1.bf16.msra.mxu0 0
        %1371 = vmatprep.subr.bf16.mxu0 0
        %1372 = vmatpush1.bf16.msra.mxu0 0
        %1373 = vmatprep.subr.bf16.mxu0 0
        %1374 = vmatpush1.bf16.msra.mxu0 0
        %1375 = vmatprep.subr.bf16.mxu0 0
        %1376 = vmatpush1.bf16.msra.mxu0 0
        %1377 = vmatprep.subr.bf16.mxu0 0
        %1378 = vmatpush1.bf16.msra.mxu0 0
        %1379 = vmatprep.subr.bf16.mxu0 0
        %1380 = vmatpush1.bf16.msra.mxu0 0
        %1381 = vmatprep.subr.bf16.mxu0 0
        %1382 = vmatpush1.bf16.msra.mxu0 0
        %1383 = vmatprep.subr.bf16.mxu0 0
        %1384 = vmatpush1.bf16.msra.mxu0 0
        %1385 = vmatprep.mubr.bf16.mxu0 0
        %1386 = vmatmul.mubr.bf16.gmra.mrb[0].mxu0 %v1299
        %v1387 = vpop.f32.mrb[0].mxu0
        %v1388 = vadd.f32 0.0, %v1387
        %v1389 = vpop.f32.mrb[0].mxu0
        %v1390 = vpop.f32.mrb[0].mxu0
        %v1391 = vadd.f32 0.0, %v1390
        %v1392 = vpop.f32.mrb[0].mxu0
        %1393 = vdwg.mxu0
        %v1394 = vld [vmem:[#allocation2] sm:$0xff]
        %v1395 = vld [vmem:[#allocation2 + $0x8] sm:$0xff]
        %v1396 = vld [vmem:[#allocation2 + $0x10] sm:$0xff]
        %v1397 = vld [vmem:[#allocation2 + $0x18] sm:$0xff]
        %v1398 = vld [vmem:[#allocation2 + $0x20] sm:$0xff]
        %v1399 = vld [vmem:[#allocation2 + $0x28] sm:$0xff]
        %v1400 = vadd.f32 %v1394, %v1345
        %v1401 = vadd.f32 %v1395, %v1347
        %v1402 = vadd.f32 %v1396, %v1388
        %v1403 = vadd.f32 %v1397, %v1349
        %v1404 = vadd.f32 %v1398, %v1351
        %v1405 = vadd.f32 %v1399, %v1391
        %1406 = vst [vmem:[#allocation2] sm:$0xff] %v1400
        %1407 = vst [vmem:[#allocation2 + $0x8] sm:$0xff] %v1401
        %1408 = vst [vmem:[#allocation2 + $0x10] sm:$0xff] %v1402
        %1409 = vst [vmem:[#allocation2 + $0x18] sm:$0xff] %v1403
        %1410 = vst [vmem:[#allocation2 + $0x20] sm:$0xff] %v1404
        %1411 = vst [vmem:[#allocation2 + $0x28] sm:$0xff] %v1405
        %v1412 = vld [vmem:[%s196] sm:$0xff]
        %s1413 = scalar_lea.vmem %s1, 64
        %v1414 = vld [vmem:[%s1413] sm:$0xf]
        %v1415 = vld [vmem:[%s1413 + $0x4] sm:$0xf]
        %v1418 = vunpack.c.l.b16 %v1414
        %v1419 = vunpack.c.l.b16 %v1415
        %v1420 = vpack.c.b16 %v1419, %v1418
        %v1422 = vcombine.high %v1412, %v1412
        %v1424 = vunpack.c.l.s4 1983009808
        %v1425 = vunpack.c.0.s8 %v1424
        %v1426 = vlaneseq
        %v1427 = vshrl.u32 %v1426, 7
        %v1428 = vsub.s32 %v1425, %v1427
        %v1429 = vrot.slane %v1412, %v1428
        %v1431 = vunpack.c.l.s4 1983009808
        %v1432 = vunpack.c.0.s8 %v1431
        %v1433 = vlaneseq
        %v1434 = vshrl.u32 %v1433, 7
        %v1435 = vsub.s32 %v1432, %v1434
        %v1436 = vrot.slane %v1422, %v1435
        %v1437 = vcombine.high %v1429, %v1429
        %v1438 = vcombine.high %v1436, %v1436
        %1439 = vrot.lane.b32.xlu0 %v1429, 112
        %v1440 = vpop.permute.xlu0 %1439
        %1441 = vrot.lane.b32.xlu0 %v1437, 112
        %v1442 = vpop.permute.xlu0 %1441
        %1443 = vrot.lane.b32.xlu0 %v1436, 112
        %v1444 = vpop.permute.xlu0 %1443
        %1445 = vrot.lane.b32.xlu0 %v1438, 112
        %v1446 = vpop.permute.xlu0 %1445
        %vm1447 = vcmask 916480
        %v1448 = vsel %vm1447, %v1440, %v1442
        %v1449 = vsel %vm1447, %v1442, %v1444
        %v1450 = vsel %vm1447, %v1444, %v1446
        %v1452 = vsel %vm237, %v1420, 0
        %v1455 = vsel %vm241, %v1448, 0
        %v1458 = vsel %vm241, %v1449, 0
        %v1461 = vsel %vm241, %v1450, 0
        %1463 = vmatprep.subr.bf16.mxu0 %v1458
        %1464 = vmatpush1.bf16.msra.mxu0 %v1455
        %1465 = vmatprep.subr.bf16.mxu0 0
        %1466 = vmatpush1.bf16.msra.mxu0 0
        %1467 = vmatprep.subr.bf16.mxu0 0
        %1468 = vmatpush1.bf16.msra.mxu0 0
        %1469 = vmatprep.subr.bf16.mxu0 0
        %1470 = vmatpush1.bf16.msra.mxu0 0
        %1471 = vmatprep.subr.bf16.mxu0 0
        %1472 = vmatpush1.bf16.msra.mxu0 0
        %1473 = vmatprep.subr.bf16.mxu0 0
        %1474 = vmatpush1.bf16.msra.mxu0 0
        %1475 = vmatprep.subr.bf16.mxu0 0
        %1476 = vmatpush1.bf16.msra.mxu0 0
        %1477 = vmatprep.subr.bf16.mxu0 0
        %1478 = vmatpush1.bf16.msra.mxu0 0
        %1479 = vmatprep.subr.bf16.mxu0 0
        %1480 = vmatpush1.bf16.msra.mxu0 0
        %1481 = vmatprep.subr.bf16.mxu0 0
        %1482 = vmatpush1.bf16.msra.mxu0 0
        %1483 = vmatprep.subr.bf16.mxu0 0
        %1484 = vmatpush1.bf16.msra.mxu0 0
        %1485 = vmatprep.subr.bf16.mxu0 0
        %1486 = vmatpush1.bf16.msra.mxu0 0
        %1487 = vmatprep.subr.bf16.mxu0 0
        %1488 = vmatpush1.bf16.msra.mxu0 0
        %1489 = vmatprep.subr.bf16.mxu0 0
        %1490 = vmatpush1.bf16.msra.mxu0 0
        %1491 = vmatprep.subr.bf16.mxu0 0
        %1492 = vmatpush1.bf16.msra.mxu0 0
        %1493 = vmatprep.subr.bf16.mxu0 0
        %1494 = vmatpush1.bf16.msra.mxu0 0
        %1495 = vmatprep.mubr.bf16.mxu0 0
        %1496 = vmatmul.mubr.bf16.gmra.mrb[0].mxu0 %v1452
        %v1497 = vpop.f32.mrb[0].mxu0
        %v1498 = vadd.f32 0.0, %v1497
        %v1499 = vpop.f32.mrb[0].mxu0
        %v1500 = vadd.f32 0.0, %v1499
        %v1501 = vpop.f32.mrb[0].mxu0
        %v1502 = vadd.f32 0.0, %v1501
        %v1503 = vpop.f32.mrb[0].mxu0
        %v1504 = vadd.f32 0.0, %v1503
        %1505 = vdwg.mxu0
        %1506 = vmatprep.subr.bf16.mxu0 0
        %1507 = vmatpush1.bf16.msra.mxu0 %v1461
        %1508 = vmatprep.subr.bf16.mxu0 0
        %1509 = vmatpush1.bf16.msra.mxu0 0
        %1510 = vmatprep.subr.bf16.mxu0 0
        %1511 = vmatpush1.bf16.msra.mxu0 0
        %1512 = vmatprep.subr.bf16.mxu0 0
        %1513 = vmatpush1.bf16.msra.mxu0 0
        %1514 = vmatprep.subr.bf16.mxu0 0
        %1515 = vmatpush1.bf16.msra.mxu0 0
        %1516 = vmatprep.subr.bf16.mxu0 0
        %1517 = vmatpush1.bf16.msra.mxu0 0
        %1518 = vmatprep.subr.bf16.mxu0 0
        %1519 = vmatpush1.bf16.msra.mxu0 0
        %1520 = vmatprep.subr.bf16.mxu0 0
        %1521 = vmatpush1.bf16.msra.mxu0 0
        %1522 = vmatprep.subr.bf16.mxu0 0
        %1523 = vmatpush1.bf16.msra.mxu0 0
        %1524 = vmatprep.subr.bf16.mxu0 0
        %1525 = vmatpush1.bf16.msra.mxu0 0
        %1526 = vmatprep.subr.bf16.mxu0 0
        %1527 = vmatpush1.bf16.msra.mxu0 0
        %1528 = vmatprep.subr.bf16.mxu0 0
        %1529 = vmatpush1.bf16.msra.mxu0 0
        %1530 = vmatprep.subr.bf16.mxu0 0
        %1531 = vmatpush1.bf16.msra.mxu0 0
        %1532 = vmatprep.subr.bf16.mxu0 0
        %1533 = vmatpush1.bf16.msra.mxu0 0
        %1534 = vmatprep.subr.bf16.mxu0 0
        %1535 = vmatpush1.bf16.msra.mxu0 0
        %1536 = vmatprep.subr.bf16.mxu0 0
        %1537 = vmatpush1.bf16.msra.mxu0 0
        %1538 = vmatprep.mubr.bf16.mxu0 0
        %1539 = vmatmul.mubr.bf16.gmra.mrb[0].mxu0 %v1452
        %v1540 = vpop.f32.mrb[0].mxu0
        %v1541 = vadd.f32 0.0, %v1540
        %v1542 = vpop.f32.mrb[0].mxu0
        %v1543 = vpop.f32.mrb[0].mxu0
        %v1544 = vadd.f32 0.0, %v1543
        %v1545 = vpop.f32.mrb[0].mxu0
        %1546 = vdwg.mxu0
        %v1547 = vld [vmem:[#allocation2] sm:$0xff]
        %v1548 = vld [vmem:[#allocation2 + $0x8] sm:$0xff]
        %v1549 = vld [vmem:[#allocation2 + $0x10] sm:$0xff]
        %v1550 = vld [vmem:[#allocation2 + $0x18] sm:$0xff]
        %v1551 = vld [vmem:[#allocation2 + $0x20] sm:$0xff]
        %v1552 = vld [vmem:[#allocation2 + $0x28] sm:$0xff]
        %v1553 = vadd.f32 %v1547, %v1498
        %v1554 = vadd.f32 %v1548, %v1500
        %v1555 = vadd.f32 %v1549, %v1541
        %v1556 = vadd.f32 %v1550, %v1502
        %v1557 = vadd.f32 %v1551, %v1504
        %v1558 = vadd.f32 %v1552, %v1544
        %1559 = vst [vmem:[#allocation2] sm:$0xff] %v1553
        %1560 = vst [vmem:[#allocation2 + $0x8] sm:$0xff] %v1554
        %1561 = vst [vmem:[#allocation2 + $0x10] sm:$0xff] %v1555
        %1562 = vst [vmem:[#allocation2 + $0x18] sm:$0xff] %v1556
        %1563 = vst [vmem:[#allocation2 + $0x20] sm:$0xff] %v1557
        %1564 = vst [vmem:[#allocation2 + $0x28] sm:$0xff] %v1558
        %v1565 = vld [vmem:[#allocation2] sm:$0xff]
        %v1566 = vld [vmem:[#allocation2 + $0x8] sm:$0xff]
        %v1567 = vld [vmem:[#allocation2 + $0x10] sm:$0xff]
        %v1568 = vld [vmem:[#allocation2 + $0x18] sm:$0xff]
        %v1569 = vld [vmem:[#allocation2 + $0x20] sm:$0xff]
        %v1570 = vld [vmem:[#allocation2 + $0x28] sm:$0xff]
        %v1571 = vld [vmem:[%s2] sm:$0xff]
        %v1572 = vld [vmem:[%s2 + $0x8] sm:$0xff]
        %1574 = vset.pattern.permute.xlu0 0
        %1575 = vperm.xlu0 %1574, %v1571
        %v1576 = vpop.permute.xlu0 %1575
        %1579 = vset.pattern.permute.xlu0 0
        %1580 = vperm.xlu0 %1579, %v1572
        %v1581 = vpop.permute.xlu0 %1580
        %v1583 = vadd.f32 %v1565, %v1576
        %v1584 = vadd.f32 %v1566, %v1576
        %v1585 = vadd.f32 %v1567, %v1576
        %v1586 = vadd.f32 %v1568, %v1581
        %v1587 = vadd.f32 %v1569, %v1581
        %v1588 = vadd.f32 %v1570, %v1581
        %1589 = vst [vmem:[%s187] sm:$0xff] %v1583
        %1590 = vst [vmem:[%s187 + $0x8] sm:$0xff] %v1584
        %1591 = vst [vmem:[%s187 + $0x10] sm:$0xff] %v1585
        %1592 = vst [vmem:[%s187 + $0x18] sm:$0xff] %v1586
        %1593 = vst [vmem:[%s187 + $0x20] sm:$0xff] %v1587
        %1594 = vst [vmem:[%s187 + $0x28] sm:$0xff] %v1588
        %s1595 = sand.u32 %s109, 1
        %s1596 = scalar_lea.sflag [#allocation4], %s1595
        %s1597 = sand.u32 %s109, 1
        %s1598 = smul.addr %s1597, 48
        %s1599 = scalar_lea.vmem [#allocation3], %s1598
        // Predicated region
        $region33: #{tpu_custom_call.1} parent=31 // pred_check
          %p1600 = pneg %p119
        $region34: #{tpu_custom_call.1} parent=31 // pred_check_branch
          %1602 = sbr.rel (%p1600) target = $region36
        $region35: #{tpu_custom_call.1} parent=31 // pred_region
          %s1603 = smul.u32 3, %s22
          %s1605 = ssub.s32 768, 768
          %1606 = vsyncadd %s1596, %s1605
          %s1607 = smul.addr %s21, 6
          %s1608 = sadd.s32 %s1603, %s1607
          %s1609 = smul.addr %s1608, 128
          %s1610 = scalar_lea.hbm %s3, %s1609
          %s1611 = sshll.u32 %s1599, 4
          %s1612 = int_to_ptr.vmem [resolvable:$true] %s1611
          %1617 = dma.vmem_to_hbm [thread:$0]  %s1612, 768, %s1610, %s1596, 384, 384, 24
        $region36: #{tpu_custom_call.1} parent=31 // pred_fallthru
          _
      $region32: #{tpu_custom_call.1} parent=5 // pred_fallthru
        _
      %p1618 = scmp.le.s32.totalorder 2, %s12
      // Predicated region
      $region37: #{tpu_custom_call.1} parent=5 // pred_check
        %p1619 = pneg %p1618
      $region38: #{tpu_custom_call.1} parent=5 // pred_check_branch
        %1621 = sbr.rel (%p1619) target = $region40
      $region39: #{tpu_custom_call.1} parent=5 // pred_region
        %s1622 = ssub.s32 %s12, 2
        // Predicated region
        $region41: #{tpu_custom_call.1} parent=39 // pred_check
          %p1623 = pneg %p125
        $region42: #{tpu_custom_call.1} parent=39 // pred_check_branch
          %1625 = sbr.rel (%p1623) target = $region44
        $region43: #{tpu_custom_call.1} parent=39 // pred_region
          %s1626 = sand.u32 %s110, 1
          %s1627 = scalar_lea.sflag [#allocation4], %s1626
          %s1628 = sand.u32 %s110, 1
          %s1629 = smul.addr %s1628, 48
          %s1630 = scalar_lea.vmem [#allocation3], %s1629
          %1631 = dma.done %s1627, 768
        $region44: #{tpu_custom_call.1} parent=39 // pred_fallthru
          _
      $region40: #{tpu_custom_call.1} parent=5 // pred_fallthru
        _
    $region6: #{tpu_custom_call.1} parent=1 // loop_footer
      %s16 = sadd.s32 1, %s12
    $region7: #{tpu_custom_call.1} parent=1 // loop_footer_branch
      %11 = sbr.rel target = $region3
    $region8: #{tpu_custom_call.1} parent=1 // loop_exit
      _
    %1632 = vsyncpa [#allocation4], 1
    %s1633 = scalar_lea.sflag [#allocation4], 1
    %1634 = vsyncpa %s1633, 1

</llo_original>
